<compile_context>
chip_gen: v7x
topology: tpu7x:2x2x1
jax: 0.10.0
libtpu: 0.0.40
codegen_flags: <defaults>
</compile_context>

<pallas_src>
import functools

import jax
import jax.numpy as jnp
from jax.experimental import pallas as pl
from jax.experimental.pallas import tpu as pltpu


def _round_up(v, m):
    return (v + m - 1) // m * m


def gru_recurrence_kernel(gi_ref, len_ref, whh_ref, bhn_ref,
                          out_ref, final_ref, h_scratch, *, hp, tt):
    """One grid step == TT GRU time steps for one batch block.

    gi_ref:   (TT, TB, 3*Hp) f32  precomputed input projection (+ folded biases)
    len_ref:  (TB, 1)  int32      sequence lengths
    whh_ref:  (Hp, 3*Hp)          fused recurrent weights [W_hr | W_hz | W_hn]
    bhn_ref:  (1, Hp)  f32        recurrent bias of the n gate (kept separate)
    out_ref:  (TT, TB, Hp) f32    padded outputs (time-major)
    final_ref:(1, TB, Hp)  f32    final hidden state
    h_scratch:(TB, Hp) f32        hidden state carried across time blocks
    """
    t_blk = pl.program_id(1)

    @pl.when(t_blk == 0)
    def _():
        h_scratch[...] = jnp.zeros_like(h_scratch)

    # Loop invariants: load weights / lengths and broadcast b_hn once per grid step.
    whh = whh_ref[...]
    lens = len_ref[...]                                        # (TB, 1) int32
    bhn = jnp.broadcast_to(bhn_ref[...], h_scratch.shape)      # (TB, Hp)
    t_base = t_blk * tt

    def step(i, h_prev):
        gi = gi_ref[i]                                         # (TB, 3*Hp) f32
        gh = jnp.dot(h_prev.astype(whh.dtype), whh,
                     preferred_element_type=jnp.float32)       # (TB, 3*Hp), one fused MXU op
        r = jax.nn.sigmoid(gi[:, :hp] + gh[:, :hp])
        z = jax.nn.sigmoid(gi[:, hp:2 * hp] + gh[:, hp:2 * hp])
        n = jnp.tanh(gi[:, 2 * hp:] + r * (gh[:, 2 * hp:] + bhn))
        h_new = n + z * (h_prev - n)                           # == (1-z)*n + z*h_prev
        # packed-sequence semantics: only advance h while t < length
        vf = ((t_base + i) < lens).astype(jnp.float32)         # (TB, 1)
        h_upd = h_prev + vf * (h_new - h_prev)
        # pad_packed_sequence: positions past each length are zero
        out_ref[i] = (vf * h_upd).astype(out_ref.dtype)
        return h_upd

    h_last = jax.lax.fori_loop(0, tt, step, h_scratch[...], unroll=True)
    h_scratch[...] = h_last

    @pl.when(t_blk == pl.num_programs(1) - 1)
    def _():
        final_ref[0] = h_last.astype(final_ref.dtype)


def encoder_forward(x, mask, lengths, w_ih, w_hh, b_ih, b_hh, *,
                    time_block=8, batch_block=None, mxu_dtype=jnp.float32):
    """Forward of the PyTorch Encoder (single-layer unidirectional GRU).

    x: (B, T, D), mask unused (the reference forward never uses it), lengths: (B,).
    w_ih: (3H, D), w_hh: (3H, H), b_ih/b_hh: (3H,)  -- PyTorch nn.GRU (r, z, n) layout.
    Returns (output (B, T, H), final (1, B, H)).  Assumes max(lengths) == T.
    """
    del mask
    f32 = jnp.float32
    B, T, D = x.shape
    H = w_hh.shape[1]

    Hp = _round_up(H, 128)                      # lane-dense gates
    TT = max(1, int(time_block))
    Tp = _round_up(T, TT)
    if batch_block is None:
        Bp = _round_up(B, 8)                    # sublane-full batch
        TB = Bp
    else:                                       # e.g. split batch across v7x's 2 TCs
        TB = _round_up(int(batch_block), 8)
        Bp = _round_up(max(B, TB), TB)

    # ---- pack / pad parameters: fused gate layout [r | z | n], each gate padded to Hp.
    wih = jnp.zeros((D, 3 * Hp), f32)
    whh = jnp.zeros((Hp, 3 * Hp), f32)
    bgi = jnp.zeros((3 * Hp,), f32)
    bhn = jnp.zeros((1, Hp), f32)
    for g in range(3):
        wih = wih.at[:, g * Hp:g * Hp + H].set(w_ih[g * H:(g + 1) * H, :].T.astype(f32))
        whh = whh.at[:H, g * Hp:g * Hp + H].set(w_hh[g * H:(g + 1) * H, :].T.astype(f32))
    # fold b_ih (and b_hh for r, z) into the hoisted input projection; keep b_hn apart.
    bgi = bgi.at[0 * Hp:0 * Hp + H].set((b_ih[0 * H:1 * H] + b_hh[0 * H:1 * H]).astype(f32))
    bgi = bgi.at[1 * Hp:1 * Hp + H].set((b_ih[1 * H:2 * H] + b_hh[1 * H:2 * H]).astype(f32))
    bgi = bgi.at[2 * Hp:2 * Hp + H].set(b_ih[2 * H:3 * H].astype(f32))
    bhn = bhn.at[0, :H].set(b_hh[2 * H:3 * H].astype(f32))
    whh = whh.astype(mxu_dtype)

    # ---- hoisted input projection: ONE big matmul over all B*T rows (not in the loop).
    gi = jnp.dot(x.reshape(B * T, D).astype(f32), wih,
                 preferred_element_type=f32) + bgi               # (B*T, 3*Hp)
    gi = gi.reshape(B, T, 3 * Hp).transpose(1, 0, 2)             # time-major (T, B, 3*Hp)
    gi = jnp.pad(gi, ((0, Tp - T), (0, Bp - B), (0, 0)))

    lens = jnp.zeros((Bp, 1), jnp.int32).at[:B, 0].set(lengths.astype(jnp.int32))

    grid = (Bp // TB, Tp // TT)

    # VMEM budget: double-buffered streaming blocks + weights; keep the default floor.
    isz = 4
    need = (2 * (TT * TB * 3 * Hp + TT * TB * Hp + TB * Hp) * isz
            + 2 * Hp * 3 * Hp * jnp.dtype(mxu_dtype).itemsize
            + TB * Hp * isz + 4 * Hp * isz + 4 * TB * isz)
    vmem_limit = min(max(32 * 1024 * 1024, int(need * 5 // 4)), 100 * 1024 * 1024)

    kernel = functools.partial(gru_recurrence_kernel, hp=Hp, tt=TT)
    grid_spec = pltpu.PrefetchScalarGridSpec(
        num_scalar_prefetch=0,
        grid=grid,
        in_specs=[
            pl.BlockSpec((TT, TB, 3 * Hp), lambda b, t: (t, b, 0)),   # gi
            pl.BlockSpec((TB, 1), lambda b, t: (b, 0)),               # lengths
            pl.BlockSpec((Hp, 3 * Hp), lambda b, t: (0, 0)),          # fused W_hh
            pl.BlockSpec((1, Hp), lambda b, t: (0, 0)),               # b_hn
        ],
        out_specs=[
            pl.BlockSpec((TT, TB, Hp), lambda b, t: (t, b, 0)),       # output (time-major)
            pl.BlockSpec((1, TB, Hp), lambda b, t: (0, b, 0)),        # final hidden
        ],
        scratch_shapes=[pltpu.VMEM((TB, Hp), jnp.float32)],
    )

    out_tm, final = pl.pallas_call(
        kernel,
        grid_spec=grid_spec,
        out_shape=(
            jax.ShapeDtypeStruct((Tp, Bp, Hp), f32),
            jax.ShapeDtypeStruct((1, Bp, Hp), f32),
        ),
        compiler_params=pltpu.CompilerParams(
            dimension_semantics=("parallel", "arbitrary"),   # batch parallel, time serial
            vmem_limit_bytes=vmem_limit,
        ),
    )(gi, lens, whh, bhn)

    out = out_tm[:T, :B, :H].transpose(1, 0, 2)                  # (B, T, H)
    final = final[:, :B, :H]                                     # (1, B, H)
    return out, final


def gru_reference(x, lengths, w_ih, w_hh, b_ih, b_hh):
    """Pure-JAX reference with packed-sequence semantics (PyTorch GRU equations)."""
    B, T, D = x.shape
    H = w_hh.shape[1]

    def step(h, inp):
        x_t, t = inp
        gi = x_t @ w_ih.T + b_ih
        gh = h @ w_hh.T + b_hh
        r = jax.nn.sigmoid(gi[:, :H] + gh[:, :H])
        z = jax.nn.sigmoid(gi[:, H:2 * H] + gh[:, H:2 * H])
        n = jnp.tanh(gi[:, 2 * H:] + r * gh[:, 2 * H:])
        h_new = (1.0 - z) * n + z * h
        valid = (t < lengths)[:, None]
        h_upd = jnp.where(valid, h_new, h)
        return h_upd, jnp.where(valid, h_upd, 0.0)

    h0 = jnp.zeros((B, H), jnp.float32)
    h_f, outs = jax.lax.scan(step, h0, (jnp.transpose(x, (1, 0, 2)), jnp.arange(T)))
    return jnp.transpose(outs, (1, 0, 2)), h_f[None]


if __name__ == "__main__":
    B, T, D, H = 2, 8, 16, 32
    key = jax.random.PRNGKey(0)
    kx, kw1, kw2, kb1, kb2 = jax.random.split(key, 5)

    x = jax.random.normal(kx, (B, T, D), jnp.float32)
    lengths = jnp.array([T, 5], jnp.int32)          # max(lengths) == T
    mask = (jnp.arange(T)[None, :] < lengths[:, None]).astype(jnp.float32)

    k = 1.0 / (H ** 0.5)
    w_ih = jax.random.uniform(kw1, (3 * H, D), jnp.float32, -k, k)
    w_hh = jax.random.uniform(kw2, (3 * H, H), jnp.float32, -k, k)
    b_ih = jax.random.uniform(kb1, (3 * H,), jnp.float32, -k, k)
    b_hh = jax.random.uniform(kb2, (3 * H,), jnp.float32, -k, k)

    fwd = jax.jit(functools.partial(encoder_forward, time_block=8))
    out, final = fwd(x, mask, lengths, w_ih, w_hh, b_ih, b_hh)
    out = jax.block_until_ready(out)
    final = jax.block_until_ready(final)

    out_ref, final_ref = gru_reference(x, lengths, w_ih, w_hh, b_ih, b_hh)
    assert out.shape == (B, T, H) and final.shape == (1, B, H)
    assert jnp.allclose(out, out_ref, atol=2e-5, rtol=2e-5), \
        float(jnp.max(jnp.abs(out - out_ref)))
    assert jnp.allclose(final, final_ref, atol=2e-5, rtol=2e-5), \
        float(jnp.max(jnp.abs(final - final_ref)))

    print("KERNEL_OK")
</pallas_src>

<mosaic_0001>
module attributes {stable_mosaic.version = 11 : i64} {
  func.func @gru_recurrence_kernel(%arg0: i32, %arg1: i32, %arg2: memref<8x8x384xf32, #tpu.memory_space<vmem>>, %arg3: memref<8x1xi32, #tpu.memory_space<vmem>>, %arg4: memref<128x384xf32, #tpu.memory_space<vmem>>, %arg5: memref<1x128xf32, #tpu.memory_space<vmem>>, %arg6: memref<8x8x128xf32, #tpu.memory_space<vmem>>, %arg7: memref<1x8x128xf32, #tpu.memory_space<vmem>>, %arg8: memref<8x128xf32, #tpu.memory_space<vmem>>) attributes {dimension_semantics = [#tpu.dimension_semantics<parallel>, #tpu.dimension_semantics<arbitrary>], iteration_bounds = array<i64: 1, 1>, scalar_prefetch = 0 : i64, scratch_operands = 1 : i64, tpu.core_type = #tpu.core_type<tc>, window_params = [{transform_indices = @transform_0, window_bounds = array<i64: 8, 8, 384>}, {transform_indices = @transform_1, window_bounds = array<i64: 8, 1>}, {pipeline_mode = #tpu.pipeline_mode<synchronous>, transform_indices = @transform_2, window_bounds = array<i64: 128, 384>}, {pipeline_mode = #tpu.pipeline_mode<synchronous>, transform_indices = @transform_3, window_bounds = array<i64: 1, 128>}, {transform_indices = @transform_4, window_bounds = array<i64: 8, 8, 128>}, {transform_indices = @transform_5, window_bounds = array<i64: 1, 8, 128>}]} {
    %c0_i32 = arith.constant 0 : i32
    %0 = arith.cmpi eq, %arg1, %c0_i32 : i32
    %1 = arith.extui %0 : i1 to i32
    %c0_i32_0 = arith.constant 0 : i32
    %2 = arith.cmpi ne, %1, %c0_i32_0 : i32
    scf.if %2 {
      %cst_69 = arith.constant 0.000000e+00 : f32
      %366 = vector.broadcast %cst_69 : f32 to vector<8x128xf32>
      %c0_70 = arith.constant 0 : index
      %c0_71 = arith.constant 0 : index
      %367 = vector.load %arg8[%c0_70, %c0_71] : memref<8x128xf32, #tpu.memory_space<vmem>>, vector<8x128xf32>
      tpu.vector_store %arg8[%c0_70, %c0_71], %366 {strides = array<i32>} : memref<8x128xf32, #tpu.memory_space<vmem>>, vector<8x128xf32>,
    } else {
    }
    %c0 = arith.constant 0 : index
    %c0_1 = arith.constant 0 : index
    %3 = vector.load %arg4[%c0, %c0_1] : memref<128x384xf32, #tpu.memory_space<vmem>>, vector<128x384xf32>
    %c0_2 = arith.constant 0 : index
    %c0_3 = arith.constant 0 : index
    %4 = vector.load %arg3[%c0_2, %c0_3] : memref<8x1xi32, #tpu.memory_space<vmem>>, vector<8x1xi32>
    %c0_4 = arith.constant 0 : index
    %c0_5 = arith.constant 0 : index
    %5 = vector.load %arg5[%c0_4, %c0_5] : memref<1x128xf32, #tpu.memory_space<vmem>>, vector<1x128xf32>
    %6 = vector.shape_cast %5 : vector<1x128xf32> to vector<1x128xf32>
    %7 = vector.broadcast %6 : vector<1x128xf32> to vector<8x128xf32>
    %c8_i32 = arith.constant 8 : i32
    %8 = arith.muli %arg1, %c8_i32 : i32
    %c0_6 = arith.constant 0 : index
    %c0_7 = arith.constant 0 : index
    %9 = vector.load %arg8[%c0_6, %c0_7] : memref<8x128xf32, #tpu.memory_space<vmem>>, vector<8x128xf32>
    %c0_i32_8 = arith.constant 0 : i32
    %10 = arith.index_cast %c0_i32_8 : i32 to index
    %c0_9 = arith.constant 0 : index
    %c0_10 = arith.constant 0 : index
    %11 = vector.load %arg2[%10, %c0_9, %c0_10] : memref<8x8x384xf32, #tpu.memory_space<vmem>>, vector<1x8x384xf32>
    %12 = vector.shape_cast %11 : vector<1x8x384xf32> to vector<8x384xf32>
    %cst = arith.constant dense<0.000000e+00> : vector<8x384xf32>
    %13 = tpu.matmul %9, %3, %cst {dimension_numbers = #tpu.dot_dimension_numbers<[1], [0], [0], [1], [0, 0, 1, 1], [], []>} : vector<8x128xf32>, vector<128x384xf32>, vector<8x384xf32> -> vector<8x384xf32>
    %14 = vector.extract_strided_slice %12 {offsets = [0, 0], sizes = [8, 128], strides = [1, 1]} : vector<8x384xf32> to vector<8x128xf32>
    %15 = vector.extract_strided_slice %13 {offsets = [0, 0], sizes = [8, 128], strides = [1, 1]} : vector<8x384xf32> to vector<8x128xf32>
    %16 = arith.addf %14, %15 : vector<8x128xf32>
    %17 = arith.negf %16 : vector<8x128xf32>
    %18 = math.exp %17 : vector<8x128xf32>
    %cst_11 = arith.constant 1.000000e+00 : f32
    %19 = vector.broadcast %cst_11 : f32 to vector<8x128xf32>
    %20 = arith.addf %19, %18 : vector<8x128xf32>
    %21 = arith.divf %19, %20 : vector<8x128xf32>
    %22 = vector.extract_strided_slice %12 {offsets = [0, 128], sizes = [8, 128], strides = [1, 1]} : vector<8x384xf32> to vector<8x128xf32>
    %23 = vector.extract_strided_slice %13 {offsets = [0, 128], sizes = [8, 128], strides = [1, 1]} : vector<8x384xf32> to vector<8x128xf32>
    %24 = arith.addf %22, %23 : vector<8x128xf32>
    %25 = arith.negf %24 : vector<8x128xf32>
    %26 = math.exp %25 : vector<8x128xf32>
    %cst_12 = arith.constant 1.000000e+00 : f32
    %27 = vector.broadcast %cst_12 : f32 to vector<8x128xf32>
    %28 = arith.addf %27, %26 : vector<8x128xf32>
    %29 = arith.divf %27, %28 : vector<8x128xf32>
    %30 = vector.extract_strided_slice %12 {offsets = [0, 256], sizes = [8, 128], strides = [1, 1]} : vector<8x384xf32> to vector<8x128xf32>
    %31 = vector.extract_strided_slice %13 {offsets = [0, 256], sizes = [8, 128], strides = [1, 1]} : vector<8x384xf32> to vector<8x128xf32>
    %32 = arith.addf %31, %7 : vector<8x128xf32>
    %33 = arith.mulf %21, %32 : vector<8x128xf32>
    %34 = arith.addf %30, %33 : vector<8x128xf32>
    %35 = math.tanh %34 : vector<8x128xf32>
    %36 = arith.subf %9, %35 : vector<8x128xf32>
    %37 = arith.mulf %29, %36 : vector<8x128xf32>
    %38 = arith.addf %35, %37 : vector<8x128xf32>
    %39 = arith.addi %8, %c0_i32_8 : i32
    %40 = vector.broadcast %39 : i32 to vector<8x1xi32>
    %41 = arith.cmpi slt, %40, %4 : vector<8x1xi32>
    %42 = arith.extui %41 : vector<8x1xi1> to vector<8x1xi32>
    %43 = arith.sitofp %42 : vector<8x1xi32> to vector<8x1xf32>
    %44 = arith.subf %38, %9 : vector<8x128xf32>
    %45 = vector.broadcast %43 : vector<8x1xf32> to vector<8x128xf32>
    %46 = arith.mulf %45, %44 : vector<8x128xf32>
    %47 = arith.addf %9, %46 : vector<8x128xf32>
    %48 = vector.broadcast %43 : vector<8x1xf32> to vector<8x128xf32>
    %49 = arith.mulf %48, %47 : vector<8x128xf32>
    %50 = arith.index_cast %c0_i32_8 : i32 to index
    %c0_13 = arith.constant 0 : index
    %c0_14 = arith.constant 0 : index
    %51 = vector.load %arg6[%50, %c0_13, %c0_14] : memref<8x8x128xf32, #tpu.memory_space<vmem>>, vector<1x8x128xf32>
    %52 = vector.shape_cast %51 : vector<1x8x128xf32> to vector<8x128xf32>
    %53 = vector.shape_cast %49 : vector<8x128xf32> to vector<1x8x128xf32>
    tpu.vector_store %arg6[%50, %c0_13, %c0_14], %53 {strides = array<i32>} : memref<8x8x128xf32, #tpu.memory_space<vmem>>, vector<1x8x128xf32>,
    %c1_i32 = arith.constant 1 : i32
    %54 = arith.index_cast %c1_i32 : i32 to index
    %c0_15 = arith.constant 0 : index
    %c0_16 = arith.constant 0 : index
    %55 = vector.load %arg2[%54, %c0_15, %c0_16] : memref<8x8x384xf32, #tpu.memory_space<vmem>>, vector<1x8x384xf32>
    %56 = vector.shape_cast %55 : vector<1x8x384xf32> to vector<8x384xf32>
    %cst_17 = arith.constant dense<0.000000e+00> : vector<8x384xf32>
    %57 = tpu.matmul %47, %3, %cst_17 {dimension_numbers = #tpu.dot_dimension_numbers<[1], [0], [0], [1], [0, 0, 1, 1], [], []>} : vector<8x128xf32>, vector<128x384xf32>, vector<8x384xf32> -> vector<8x384xf32>
    %58 = vector.extract_strided_slice %56 {offsets = [0, 0], sizes = [8, 128], strides = [1, 1]} : vector<8x384xf32> to vector<8x128xf32>
    %59 = vector.extract_strided_slice %57 {offsets = [0, 0], sizes = [8, 128], strides = [1, 1]} : vector<8x384xf32> to vector<8x128xf32>
    %60 = arith.addf %58, %59 : vector<8x128xf32>
    %61 = arith.negf %60 : vector<8x128xf32>
    %62 = math.exp %61 : vector<8x128xf32>
    %cst_18 = arith.constant 1.000000e+00 : f32
    %63 = vector.broadcast %cst_18 : f32 to vector<8x128xf32>
    %64 = arith.addf %63, %62 : vector<8x128xf32>
    %65 = arith.divf %63, %64 : vector<8x128xf32>
    %66 = vector.extract_strided_slice %56 {offsets = [0, 128], sizes = [8, 128], strides = [1, 1]} : vector<8x384xf32> to vector<8x128xf32>
    %67 = vector.extract_strided_slice %57 {offsets = [0, 128], sizes = [8, 128], strides = [1, 1]} : vector<8x384xf32> to vector<8x128xf32>
    %68 = arith.addf %66, %67 : vector<8x128xf32>
    %69 = arith.negf %68 : vector<8x128xf32>
    %70 = math.exp %69 : vector<8x128xf32>
    %cst_19 = arith.constant 1.000000e+00 : f32
    %71 = vector.broadcast %cst_19 : f32 to vector<8x128xf32>
    %72 = arith.addf %71, %70 : vector<8x128xf32>
    %73 = arith.divf %71, %72 : vector<8x128xf32>
    %74 = vector.extract_strided_slice %56 {offsets = [0, 256], sizes = [8, 128], strides = [1, 1]} : vector<8x384xf32> to vector<8x128xf32>
    %75 = vector.extract_strided_slice %57 {offsets = [0, 256], sizes = [8, 128], strides = [1, 1]} : vector<8x384xf32> to vector<8x128xf32>
    %76 = arith.addf %75, %7 : vector<8x128xf32>
    %77 = arith.mulf %65, %76 : vector<8x128xf32>
    %78 = arith.addf %74, %77 : vector<8x128xf32>
    %79 = math.tanh %78 : vector<8x128xf32>
    %80 = arith.subf %47, %79 : vector<8x128xf32>
    %81 = arith.mulf %73, %80 : vector<8x128xf32>
    %82 = arith.addf %79, %81 : vector<8x128xf32>
    %83 = arith.addi %8, %c1_i32 : i32
    %84 = vector.broadcast %83 : i32 to vector<8x1xi32>
    %85 = arith.cmpi slt, %84, %4 : vector<8x1xi32>
    %86 = arith.extui %85 : vector<8x1xi1> to vector<8x1xi32>
    %87 = arith.sitofp %86 : vector<8x1xi32> to vector<8x1xf32>
    %88 = arith.subf %82, %47 : vector<8x128xf32>
    %89 = vector.broadcast %87 : vector<8x1xf32> to vector<8x128xf32>
    %90 = arith.mulf %89, %88 : vector<8x128xf32>
    %91 = arith.addf %47, %90 : vector<8x128xf32>
    %92 = vector.broadcast %87 : vector<8x1xf32> to vector<8x128xf32>
    %93 = arith.mulf %92, %91 : vector<8x128xf32>
    %94 = arith.index_cast %c1_i32 : i32 to index
    %c0_20 = arith.constant 0 : index
    %c0_21 = arith.constant 0 : index
    %95 = vector.load %arg6[%94, %c0_20, %c0_21] : memref<8x8x128xf32, #tpu.memory_space<vmem>>, vector<1x8x128xf32>
    %96 = vector.shape_cast %95 : vector<1x8x128xf32> to vector<8x128xf32>
    %97 = vector.shape_cast %93 : vector<8x128xf32> to vector<1x8x128xf32>
    tpu.vector_store %arg6[%94, %c0_20, %c0_21], %97 {strides = array<i32>} : memref<8x8x128xf32, #tpu.memory_space<vmem>>, vector<1x8x128xf32>,
    %c2_i32 = arith.constant 2 : i32
    %98 = arith.index_cast %c2_i32 : i32 to index
    %c0_22 = arith.constant 0 : index
    %c0_23 = arith.constant 0 : index
    %99 = vector.load %arg2[%98, %c0_22, %c0_23] : memref<8x8x384xf32, #tpu.memory_space<vmem>>, vector<1x8x384xf32>
    %100 = vector.shape_cast %99 : vector<1x8x384xf32> to vector<8x384xf32>
    %cst_24 = arith.constant dense<0.000000e+00> : vector<8x384xf32>
    %101 = tpu.matmul %91, %3, %cst_24 {dimension_numbers = #tpu.dot_dimension_numbers<[1], [0], [0], [1], [0, 0, 1, 1], [], []>} : vector<8x128xf32>, vector<128x384xf32>, vector<8x384xf32> -> vector<8x384xf32>
    %102 = vector.extract_strided_slice %100 {offsets = [0, 0], sizes = [8, 128], strides = [1, 1]} : vector<8x384xf32> to vector<8x128xf32>
    %103 = vector.extract_strided_slice %101 {offsets = [0, 0], sizes = [8, 128], strides = [1, 1]} : vector<8x384xf32> to vector<8x128xf32>
    %104 = arith.addf %102, %103 : vector<8x128xf32>
    %105 = arith.negf %104 : vector<8x128xf32>
    %106 = math.exp %105 : vector<8x128xf32>
    %cst_25 = arith.constant 1.000000e+00 : f32
    %107 = vector.broadcast %cst_25 : f32 to vector<8x128xf32>
    %108 = arith.addf %107, %106 : vector<8x128xf32>
    %109 = arith.divf %107, %108 : vector<8x128xf32>
    %110 = vector.extract_strided_slice %100 {offsets = [0, 128], sizes = [8, 128], strides = [1, 1]} : vector<8x384xf32> to vector<8x128xf32>
    %111 = vector.extract_strided_slice %101 {offsets = [0, 128], sizes = [8, 128], strides = [1, 1]} : vector<8x384xf32> to vector<8x128xf32>
    %112 = arith.addf %110, %111 : vector<8x128xf32>
    %113 = arith.negf %112 : vector<8x128xf32>
    %114 = math.exp %113 : vector<8x128xf32>
    %cst_26 = arith.constant 1.000000e+00 : f32
    %115 = vector.broadcast %cst_26 : f32 to vector<8x128xf32>
    %116 = arith.addf %115, %114 : vector<8x128xf32>
    %117 = arith.divf %115, %116 : vector<8x128xf32>
    %118 = vector.extract_strided_slice %100 {offsets = [0, 256], sizes = [8, 128], strides = [1, 1]} : vector<8x384xf32> to vector<8x128xf32>
    %119 = vector.extract_strided_slice %101 {offsets = [0, 256], sizes = [8, 128], strides = [1, 1]} : vector<8x384xf32> to vector<8x128xf32>
    %120 = arith.addf %119, %7 : vector<8x128xf32>
    %121 = arith.mulf %109, %120 : vector<8x128xf32>
    %122 = arith.addf %118, %121 : vector<8x128xf32>
    %123 = math.tanh %122 : vector<8x128xf32>
    %124 = arith.subf %91, %123 : vector<8x128xf32>
    %125 = arith.mulf %117, %124 : vector<8x128xf32>
    %126 = arith.addf %123, %125 : vector<8x128xf32>
    %127 = arith.addi %8, %c2_i32 : i32
    %128 = vector.broadcast %127 : i32 to vector<8x1xi32>
    %129 = arith.cmpi slt, %128, %4 : vector<8x1xi32>
    %130 = arith.extui %129 : vector<8x1xi1> to vector<8x1xi32>
    %131 = arith.sitofp %130 : vector<8x1xi32> to vector<8x1xf32>
    %132 = arith.subf %126, %91 : vector<8x128xf32>
    %133 = vector.broadcast %131 : vector<8x1xf32> to vector<8x128xf32>
    %134 = arith.mulf %133, %132 : vector<8x128xf32>
    %135 = arith.addf %91, %134 : vector<8x128xf32>
    %136 = vector.broadcast %131 : vector<8x1xf32> to vector<8x128xf32>
    %137 = arith.mulf %136, %135 : vector<8x128xf32>
    %138 = arith.index_cast %c2_i32 : i32 to index
    %c0_27 = arith.constant 0 : index
    %c0_28 = arith.constant 0 : index
    %139 = vector.load %arg6[%138, %c0_27, %c0_28] : memref<8x8x128xf32, #tpu.memory_space<vmem>>, vector<1x8x128xf32>
    %140 = vector.shape_cast %139 : vector<1x8x128xf32> to vector<8x128xf32>
    %141 = vector.shape_cast %137 : vector<8x128xf32> to vector<1x8x128xf32>
    tpu.vector_store %arg6[%138, %c0_27, %c0_28], %141 {strides = array<i32>} : memref<8x8x128xf32, #tpu.memory_space<vmem>>, vector<1x8x128xf32>,
    %c3_i32 = arith.constant 3 : i32
    %142 = arith.index_cast %c3_i32 : i32 to index
    %c0_29 = arith.constant 0 : index
    %c0_30 = arith.constant 0 : index
    %143 = vector.load %arg2[%142, %c0_29, %c0_30] : memref<8x8x384xf32, #tpu.memory_space<vmem>>, vector<1x8x384xf32>
    %144 = vector.shape_cast %143 : vector<1x8x384xf32> to vector<8x384xf32>
    %cst_31 = arith.constant dense<0.000000e+00> : vector<8x384xf32>
    %145 = tpu.matmul %135, %3, %cst_31 {dimension_numbers = #tpu.dot_dimension_numbers<[1], [0], [0], [1], [0, 0, 1, 1], [], []>} : vector<8x128xf32>, vector<128x384xf32>, vector<8x384xf32> -> vector<8x384xf32>
    %146 = vector.extract_strided_slice %144 {offsets = [0, 0], sizes = [8, 128], strides = [1, 1]} : vector<8x384xf32> to vector<8x128xf32>
    %147 = vector.extract_strided_slice %145 {offsets = [0, 0], sizes = [8, 128], strides = [1, 1]} : vector<8x384xf32> to vector<8x128xf32>
    %148 = arith.addf %146, %147 : vector<8x128xf32>
    %149 = arith.negf %148 : vector<8x128xf32>
    %150 = math.exp %149 : vector<8x128xf32>
    %cst_32 = arith.constant 1.000000e+00 : f32
    %151 = vector.broadcast %cst_32 : f32 to vector<8x128xf32>
    %152 = arith.addf %151, %150 : vector<8x128xf32>
    %153 = arith.divf %151, %152 : vector<8x128xf32>
    %154 = vector.extract_strided_slice %144 {offsets = [0, 128], sizes = [8, 128], strides = [1, 1]} : vector<8x384xf32> to vector<8x128xf32>
    %155 = vector.extract_strided_slice %145 {offsets = [0, 128], sizes = [8, 128], strides = [1, 1]} : vector<8x384xf32> to vector<8x128xf32>
    %156 = arith.addf %154, %155 : vector<8x128xf32>
    %157 = arith.negf %156 : vector<8x128xf32>
    %158 = math.exp %157 : vector<8x128xf32>
    %cst_33 = arith.constant 1.000000e+00 : f32
    %159 = vector.broadcast %cst_33 : f32 to vector<8x128xf32>
    %160 = arith.addf %159, %158 : vector<8x128xf32>
    %161 = arith.divf %159, %160 : vector<8x128xf32>
    %162 = vector.extract_strided_slice %144 {offsets = [0, 256], sizes = [8, 128], strides = [1, 1]} : vector<8x384xf32> to vector<8x128xf32>
    %163 = vector.extract_strided_slice %145 {offsets = [0, 256], sizes = [8, 128], strides = [1, 1]} : vector<8x384xf32> to vector<8x128xf32>
    %164 = arith.addf %163, %7 : vector<8x128xf32>
    %165 = arith.mulf %153, %164 : vector<8x128xf32>
    %166 = arith.addf %162, %165 : vector<8x128xf32>
    %167 = math.tanh %166 : vector<8x128xf32>
    %168 = arith.subf %135, %167 : vector<8x128xf32>
    %169 = arith.mulf %161, %168 : vector<8x128xf32>
    %170 = arith.addf %167, %169 : vector<8x128xf32>
    %171 = arith.addi %8, %c3_i32 : i32
    %172 = vector.broadcast %171 : i32 to vector<8x1xi32>
    %173 = arith.cmpi slt, %172, %4 : vector<8x1xi32>
    %174 = arith.extui %173 : vector<8x1xi1> to vector<8x1xi32>
    %175 = arith.sitofp %174 : vector<8x1xi32> to vector<8x1xf32>
    %176 = arith.subf %170, %135 : vector<8x128xf32>
    %177 = vector.broadcast %175 : vector<8x1xf32> to vector<8x128xf32>
    %178 = arith.mulf %177, %176 : vector<8x128xf32>
    %179 = arith.addf %135, %178 : vector<8x128xf32>
    %180 = vector.broadcast %175 : vector<8x1xf32> to vector<8x128xf32>
    %181 = arith.mulf %180, %179 : vector<8x128xf32>
    %182 = arith.index_cast %c3_i32 : i32 to index
    %c0_34 = arith.constant 0 : index
    %c0_35 = arith.constant 0 : index
    %183 = vector.load %arg6[%182, %c0_34, %c0_35] : memref<8x8x128xf32, #tpu.memory_space<vmem>>, vector<1x8x128xf32>
    %184 = vector.shape_cast %183 : vector<1x8x128xf32> to vector<8x128xf32>
    %185 = vector.shape_cast %181 : vector<8x128xf32> to vector<1x8x128xf32>
    tpu.vector_store %arg6[%182, %c0_34, %c0_35], %185 {strides = array<i32>} : memref<8x8x128xf32, #tpu.memory_space<vmem>>, vector<1x8x128xf32>,
    %c4_i32 = arith.constant 4 : i32
    %186 = arith.index_cast %c4_i32 : i32 to index
    %c0_36 = arith.constant 0 : index
    %c0_37 = arith.constant 0 : index
    %187 = vector.load %arg2[%186, %c0_36, %c0_37] : memref<8x8x384xf32, #tpu.memory_space<vmem>>, vector<1x8x384xf32>
    %188 = vector.shape_cast %187 : vector<1x8x384xf32> to vector<8x384xf32>
    %cst_38 = arith.constant dense<0.000000e+00> : vector<8x384xf32>
    %189 = tpu.matmul %179, %3, %cst_38 {dimension_numbers = #tpu.dot_dimension_numbers<[1], [0], [0], [1], [0, 0, 1, 1], [], []>} : vector<8x128xf32>, vector<128x384xf32>, vector<8x384xf32> -> vector<8x384xf32>
    %190 = vector.extract_strided_slice %188 {offsets = [0, 0], sizes = [8, 128], strides = [1, 1]} : vector<8x384xf32> to vector<8x128xf32>
    %191 = vector.extract_strided_slice %189 {offsets = [0, 0], sizes = [8, 128], strides = [1, 1]} : vector<8x384xf32> to vector<8x128xf32>
    %192 = arith.addf %190, %191 : vector<8x128xf32>
    %193 = arith.negf %192 : vector<8x128xf32>
    %194 = math.exp %193 : vector<8x128xf32>
    %cst_39 = arith.constant 1.000000e+00 : f32
    %195 = vector.broadcast %cst_39 : f32 to vector<8x128xf32>
    %196 = arith.addf %195, %194 : vector<8x128xf32>
    %197 = arith.divf %195, %196 : vector<8x128xf32>
    %198 = vector.extract_strided_slice %188 {offsets = [0, 128], sizes = [8, 128], strides = [1, 1]} : vector<8x384xf32> to vector<8x128xf32>
    %199 = vector.extract_strided_slice %189 {offsets = [0, 128], sizes = [8, 128], strides = [1, 1]} : vector<8x384xf32> to vector<8x128xf32>
    %200 = arith.addf %198, %199 : vector<8x128xf32>
    %201 = arith.negf %200 : vector<8x128xf32>
    %202 = math.exp %201 : vector<8x128xf32>
    %cst_40 = arith.constant 1.000000e+00 : f32
    %203 = vector.broadcast %cst_40 : f32 to vector<8x128xf32>
    %204 = arith.addf %203, %202 : vector<8x128xf32>
    %205 = arith.divf %203, %204 : vector<8x128xf32>
    %206 = vector.extract_strided_slice %188 {offsets = [0, 256], sizes = [8, 128], strides = [1, 1]} : vector<8x384xf32> to vector<8x128xf32>
    %207 = vector.extract_strided_slice %189 {offsets = [0, 256], sizes = [8, 128], strides = [1, 1]} : vector<8x384xf32> to vector<8x128xf32>
    %208 = arith.addf %207, %7 : vector<8x128xf32>
    %209 = arith.mulf %197, %208 : vector<8x128xf32>
    %210 = arith.addf %206, %209 : vector<8x128xf32>
    %211 = math.tanh %210 : vector<8x128xf32>
    %212 = arith.subf %179, %211 : vector<8x128xf32>
    %213 = arith.mulf %205, %212 : vector<8x128xf32>
    %214 = arith.addf %211, %213 : vector<8x128xf32>
    %215 = arith.addi %8, %c4_i32 : i32
    %216 = vector.broadcast %215 : i32 to vector<8x1xi32>
    %217 = arith.cmpi slt, %216, %4 : vector<8x1xi32>
    %218 = arith.extui %217 : vector<8x1xi1> to vector<8x1xi32>
    %219 = arith.sitofp %218 : vector<8x1xi32> to vector<8x1xf32>
    %220 = arith.subf %214, %179 : vector<8x128xf32>
    %221 = vector.broadcast %219 : vector<8x1xf32> to vector<8x128xf32>
    %222 = arith.mulf %221, %220 : vector<8x128xf32>
    %223 = arith.addf %179, %222 : vector<8x128xf32>
    %224 = vector.broadcast %219 : vector<8x1xf32> to vector<8x128xf32>
    %225 = arith.mulf %224, %223 : vector<8x128xf32>
    %226 = arith.index_cast %c4_i32 : i32 to index
    %c0_41 = arith.constant 0 : index
    %c0_42 = arith.constant 0 : index
    %227 = vector.load %arg6[%226, %c0_41, %c0_42] : memref<8x8x128xf32, #tpu.memory_space<vmem>>, vector<1x8x128xf32>
    %228 = vector.shape_cast %227 : vector<1x8x128xf32> to vector<8x128xf32>
    %229 = vector.shape_cast %225 : vector<8x128xf32> to vector<1x8x128xf32>
    tpu.vector_store %arg6[%226, %c0_41, %c0_42], %229 {strides = array<i32>} : memref<8x8x128xf32, #tpu.memory_space<vmem>>, vector<1x8x128xf32>,
    %c5_i32 = arith.constant 5 : i32
    %230 = arith.index_cast %c5_i32 : i32 to index
    %c0_43 = arith.constant 0 : index
    %c0_44 = arith.constant 0 : index
    %231 = vector.load %arg2[%230, %c0_43, %c0_44] : memref<8x8x384xf32, #tpu.memory_space<vmem>>, vector<1x8x384xf32>
    %232 = vector.shape_cast %231 : vector<1x8x384xf32> to vector<8x384xf32>
    %cst_45 = arith.constant dense<0.000000e+00> : vector<8x384xf32>
    %233 = tpu.matmul %223, %3, %cst_45 {dimension_numbers = #tpu.dot_dimension_numbers<[1], [0], [0], [1], [0, 0, 1, 1], [], []>} : vector<8x128xf32>, vector<128x384xf32>, vector<8x384xf32> -> vector<8x384xf32>
    %234 = vector.extract_strided_slice %232 {offsets = [0, 0], sizes = [8, 128], strides = [1, 1]} : vector<8x384xf32> to vector<8x128xf32>
    %235 = vector.extract_strided_slice %233 {offsets = [0, 0], sizes = [8, 128], strides = [1, 1]} : vector<8x384xf32> to vector<8x128xf32>
    %236 = arith.addf %234, %235 : vector<8x128xf32>
    %237 = arith.negf %236 : vector<8x128xf32>
    %238 = math.exp %237 : vector<8x128xf32>
    %cst_46 = arith.constant 1.000000e+00 : f32
    %239 = vector.broadcast %cst_46 : f32 to vector<8x128xf32>
    %240 = arith.addf %239, %238 : vector<8x128xf32>
    %241 = arith.divf %239, %240 : vector<8x128xf32>
    %242 = vector.extract_strided_slice %232 {offsets = [0, 128], sizes = [8, 128], strides = [1, 1]} : vector<8x384xf32> to vector<8x128xf32>
    %243 = vector.extract_strided_slice %233 {offsets = [0, 128], sizes = [8, 128], strides = [1, 1]} : vector<8x384xf32> to vector<8x128xf32>
    %244 = arith.addf %242, %243 : vector<8x128xf32>
    %245 = arith.negf %244 : vector<8x128xf32>
    %246 = math.exp %245 : vector<8x128xf32>
    %cst_47 = arith.constant 1.000000e+00 : f32
    %247 = vector.broadcast %cst_47 : f32 to vector<8x128xf32>
    %248 = arith.addf %247, %246 : vector<8x128xf32>
    %249 = arith.divf %247, %248 : vector<8x128xf32>
    %250 = vector.extract_strided_slice %232 {offsets = [0, 256], sizes = [8, 128], strides = [1, 1]} : vector<8x384xf32> to vector<8x128xf32>
    %251 = vector.extract_strided_slice %233 {offsets = [0, 256], sizes = [8, 128], strides = [1, 1]} : vector<8x384xf32> to vector<8x128xf32>
    %252 = arith.addf %251, %7 : vector<8x128xf32>
    %253 = arith.mulf %241, %252 : vector<8x128xf32>
    %254 = arith.addf %250, %253 : vector<8x128xf32>
    %255 = math.tanh %254 : vector<8x128xf32>
    %256 = arith.subf %223, %255 : vector<8x128xf32>
    %257 = arith.mulf %249, %256 : vector<8x128xf32>
    %258 = arith.addf %255, %257 : vector<8x128xf32>
    %259 = arith.addi %8, %c5_i32 : i32
    %260 = vector.broadcast %259 : i32 to vector<8x1xi32>
    %261 = arith.cmpi slt, %260, %4 : vector<8x1xi32>
    %262 = arith.extui %261 : vector<8x1xi1> to vector<8x1xi32>
    %263 = arith.sitofp %262 : vector<8x1xi32> to vector<8x1xf32>
    %264 = arith.subf %258, %223 : vector<8x128xf32>
    %265 = vector.broadcast %263 : vector<8x1xf32> to vector<8x128xf32>
    %266 = arith.mulf %265, %264 : vector<8x128xf32>
    %267 = arith.addf %223, %266 : vector<8x128xf32>
    %268 = vector.broadcast %263 : vector<8x1xf32> to vector<8x128xf32>
    %269 = arith.mulf %268, %267 : vector<8x128xf32>
    %270 = arith.index_cast %c5_i32 : i32 to index
    %c0_48 = arith.constant 0 : index
    %c0_49 = arith.constant 0 : index
    %271 = vector.load %arg6[%270, %c0_48, %c0_49] : memref<8x8x128xf32, #tpu.memory_space<vmem>>, vector<1x8x128xf32>
    %272 = vector.shape_cast %271 : vector<1x8x128xf32> to vector<8x128xf32>
    %273 = vector.shape_cast %269 : vector<8x128xf32> to vector<1x8x128xf32>
    tpu.vector_store %arg6[%270, %c0_48, %c0_49], %273 {strides = array<i32>} : memref<8x8x128xf32, #tpu.memory_space<vmem>>, vector<1x8x128xf32>,
    %c6_i32 = arith.constant 6 : i32
    %274 = arith.index_cast %c6_i32 : i32 to index
    %c0_50 = arith.constant 0 : index
    %c0_51 = arith.constant 0 : index
    %275 = vector.load %arg2[%274, %c0_50, %c0_51] : memref<8x8x384xf32, #tpu.memory_space<vmem>>, vector<1x8x384xf32>
    %276 = vector.shape_cast %275 : vector<1x8x384xf32> to vector<8x384xf32>
    %cst_52 = arith.constant dense<0.000000e+00> : vector<8x384xf32>
    %277 = tpu.matmul %267, %3, %cst_52 {dimension_numbers = #tpu.dot_dimension_numbers<[1], [0], [0], [1], [0, 0, 1, 1], [], []>} : vector<8x128xf32>, vector<128x384xf32>, vector<8x384xf32> -> vector<8x384xf32>
    %278 = vector.extract_strided_slice %276 {offsets = [0, 0], sizes = [8, 128], strides = [1, 1]} : vector<8x384xf32> to vector<8x128xf32>
    %279 = vector.extract_strided_slice %277 {offsets = [0, 0], sizes = [8, 128], strides = [1, 1]} : vector<8x384xf32> to vector<8x128xf32>
    %280 = arith.addf %278, %279 : vector<8x128xf32>
    %281 = arith.negf %280 : vector<8x128xf32>
    %282 = math.exp %281 : vector<8x128xf32>
    %cst_53 = arith.constant 1.000000e+00 : f32
    %283 = vector.broadcast %cst_53 : f32 to vector<8x128xf32>
    %284 = arith.addf %283, %282 : vector<8x128xf32>
    %285 = arith.divf %283, %284 : vector<8x128xf32>
    %286 = vector.extract_strided_slice %276 {offsets = [0, 128], sizes = [8, 128], strides = [1, 1]} : vector<8x384xf32> to vector<8x128xf32>
    %287 = vector.extract_strided_slice %277 {offsets = [0, 128], sizes = [8, 128], strides = [1, 1]} : vector<8x384xf32> to vector<8x128xf32>
    %288 = arith.addf %286, %287 : vector<8x128xf32>
    %289 = arith.negf %288 : vector<8x128xf32>
    %290 = math.exp %289 : vector<8x128xf32>
    %cst_54 = arith.constant 1.000000e+00 : f32
    %291 = vector.broadcast %cst_54 : f32 to vector<8x128xf32>
    %292 = arith.addf %291, %290 : vector<8x128xf32>
    %293 = arith.divf %291, %292 : vector<8x128xf32>
    %294 = vector.extract_strided_slice %276 {offsets = [0, 256], sizes = [8, 128], strides = [1, 1]} : vector<8x384xf32> to vector<8x128xf32>
    %295 = vector.extract_strided_slice %277 {offsets = [0, 256], sizes = [8, 128], strides = [1, 1]} : vector<8x384xf32> to vector<8x128xf32>
    %296 = arith.addf %295, %7 : vector<8x128xf32>
    %297 = arith.mulf %285, %296 : vector<8x128xf32>
    %298 = arith.addf %294, %297 : vector<8x128xf32>
    %299 = math.tanh %298 : vector<8x128xf32>
    %300 = arith.subf %267, %299 : vector<8x128xf32>
    %301 = arith.mulf %293, %300 : vector<8x128xf32>
    %302 = arith.addf %299, %301 : vector<8x128xf32>
    %303 = arith.addi %8, %c6_i32 : i32
    %304 = vector.broadcast %303 : i32 to vector<8x1xi32>
    %305 = arith.cmpi slt, %304, %4 : vector<8x1xi32>
    %306 = arith.extui %305 : vector<8x1xi1> to vector<8x1xi32>
    %307 = arith.sitofp %306 : vector<8x1xi32> to vector<8x1xf32>
    %308 = arith.subf %302, %267 : vector<8x128xf32>
    %309 = vector.broadcast %307 : vector<8x1xf32> to vector<8x128xf32>
    %310 = arith.mulf %309, %308 : vector<8x128xf32>
    %311 = arith.addf %267, %310 : vector<8x128xf32>
    %312 = vector.broadcast %307 : vector<8x1xf32> to vector<8x128xf32>
    %313 = arith.mulf %312, %311 : vector<8x128xf32>
    %314 = arith.index_cast %c6_i32 : i32 to index
    %c0_55 = arith.constant 0 : index
    %c0_56 = arith.constant 0 : index
    %315 = vector.load %arg6[%314, %c0_55, %c0_56] : memref<8x8x128xf32, #tpu.memory_space<vmem>>, vector<1x8x128xf32>
    %316 = vector.shape_cast %315 : vector<1x8x128xf32> to vector<8x128xf32>
    %317 = vector.shape_cast %313 : vector<8x128xf32> to vector<1x8x128xf32>
    tpu.vector_store %arg6[%314, %c0_55, %c0_56], %317 {strides = array<i32>} : memref<8x8x128xf32, #tpu.memory_space<vmem>>, vector<1x8x128xf32>,
    %c7_i32 = arith.constant 7 : i32
    %318 = arith.index_cast %c7_i32 : i32 to index
    %c0_57 = arith.constant 0 : index
    %c0_58 = arith.constant 0 : index
    %319 = vector.load %arg2[%318, %c0_57, %c0_58] : memref<8x8x384xf32, #tpu.memory_space<vmem>>, vector<1x8x384xf32>
    %320 = vector.shape_cast %319 : vector<1x8x384xf32> to vector<8x384xf32>
    %cst_59 = arith.constant dense<0.000000e+00> : vector<8x384xf32>
    %321 = tpu.matmul %311, %3, %cst_59 {dimension_numbers = #tpu.dot_dimension_numbers<[1], [0], [0], [1], [0, 0, 1, 1], [], []>} : vector<8x128xf32>, vector<128x384xf32>, vector<8x384xf32> -> vector<8x384xf32>
    %322 = vector.extract_strided_slice %320 {offsets = [0, 0], sizes = [8, 128], strides = [1, 1]} : vector<8x384xf32> to vector<8x128xf32>
    %323 = vector.extract_strided_slice %321 {offsets = [0, 0], sizes = [8, 128], strides = [1, 1]} : vector<8x384xf32> to vector<8x128xf32>
    %324 = arith.addf %322, %323 : vector<8x128xf32>
    %325 = arith.negf %324 : vector<8x128xf32>
    %326 = math.exp %325 : vector<8x128xf32>
    %cst_60 = arith.constant 1.000000e+00 : f32
    %327 = vector.broadcast %cst_60 : f32 to vector<8x128xf32>
    %328 = arith.addf %327, %326 : vector<8x128xf32>
    %329 = arith.divf %327, %328 : vector<8x128xf32>
    %330 = vector.extract_strided_slice %320 {offsets = [0, 128], sizes = [8, 128], strides = [1, 1]} : vector<8x384xf32> to vector<8x128xf32>
    %331 = vector.extract_strided_slice %321 {offsets = [0, 128], sizes = [8, 128], strides = [1, 1]} : vector<8x384xf32> to vector<8x128xf32>
    %332 = arith.addf %330, %331 : vector<8x128xf32>
    %333 = arith.negf %332 : vector<8x128xf32>
    %334 = math.exp %333 : vector<8x128xf32>
    %cst_61 = arith.constant 1.000000e+00 : f32
    %335 = vector.broadcast %cst_61 : f32 to vector<8x128xf32>
    %336 = arith.addf %335, %334 : vector<8x128xf32>
    %337 = arith.divf %335, %336 : vector<8x128xf32>
    %338 = vector.extract_strided_slice %320 {offsets = [0, 256], sizes = [8, 128], strides = [1, 1]} : vector<8x384xf32> to vector<8x128xf32>
    %339 = vector.extract_strided_slice %321 {offsets = [0, 256], sizes = [8, 128], strides = [1, 1]} : vector<8x384xf32> to vector<8x128xf32>
    %340 = arith.addf %339, %7 : vector<8x128xf32>
    %341 = arith.mulf %329, %340 : vector<8x128xf32>
    %342 = arith.addf %338, %341 : vector<8x128xf32>
    %343 = math.tanh %342 : vector<8x128xf32>
    %344 = arith.subf %311, %343 : vector<8x128xf32>
    %345 = arith.mulf %337, %344 : vector<8x128xf32>
    %346 = arith.addf %343, %345 : vector<8x128xf32>
    %347 = arith.addi %8, %c7_i32 : i32
    %348 = vector.broadcast %347 : i32 to vector<8x1xi32>
    %349 = arith.cmpi slt, %348, %4 : vector<8x1xi32>
    %350 = arith.extui %349 : vector<8x1xi1> to vector<8x1xi32>
    %351 = arith.sitofp %350 : vector<8x1xi32> to vector<8x1xf32>
    %352 = arith.subf %346, %311 : vector<8x128xf32>
    %353 = vector.broadcast %351 : vector<8x1xf32> to vector<8x128xf32>
    %354 = arith.mulf %353, %352 : vector<8x128xf32>
    %355 = arith.addf %311, %354 : vector<8x128xf32>
    %356 = vector.broadcast %351 : vector<8x1xf32> to vector<8x128xf32>
    %357 = arith.mulf %356, %355 : vector<8x128xf32>
    %358 = arith.index_cast %c7_i32 : i32 to index
    %c0_62 = arith.constant 0 : index
    %c0_63 = arith.constant 0 : index
    %359 = vector.load %arg6[%358, %c0_62, %c0_63] : memref<8x8x128xf32, #tpu.memory_space<vmem>>, vector<1x8x128xf32>
    %360 = vector.shape_cast %359 : vector<1x8x128xf32> to vector<8x128xf32>
    %361 = vector.shape_cast %357 : vector<8x128xf32> to vector<1x8x128xf32>
    tpu.vector_store %arg6[%358, %c0_62, %c0_63], %361 {strides = array<i32>} : memref<8x8x128xf32, #tpu.memory_space<vmem>>, vector<1x8x128xf32>,
    %c8_i32_64 = arith.constant 8 : i32
    %c0_65 = arith.constant 0 : index
    %c0_66 = arith.constant 0 : index
    %362 = vector.load %arg8[%c0_65, %c0_66] : memref<8x128xf32, #tpu.memory_space<vmem>>, vector<8x128xf32>
    tpu.vector_store %arg8[%c0_65, %c0_66], %355 {strides = array<i32>} : memref<8x128xf32, #tpu.memory_space<vmem>>, vector<8x128xf32>,
    %c0_i32_67 = arith.constant 0 : i32
    %363 = arith.cmpi eq, %arg1, %c0_i32_67 : i32
    %364 = arith.extui %363 : i1 to i32
    %c0_i32_68 = arith.constant 0 : i32
    %365 = arith.cmpi ne, %364, %c0_i32_68 : i32
    scf.if %365 {
      %c0_69 = arith.constant 0 : index
      %c0_70 = arith.constant 0 : index
      %c0_71 = arith.constant 0 : index
      %366 = vector.load %arg7[%c0_69, %c0_70, %c0_71] : memref<1x8x128xf32, #tpu.memory_space<vmem>>, vector<1x8x128xf32>
      %367 = vector.shape_cast %366 : vector<1x8x128xf32> to vector<8x128xf32>
      %368 = vector.shape_cast %355 : vector<8x128xf32> to vector<1x8x128xf32>
      tpu.vector_store %arg7[%c0_69, %c0_70, %c0_71], %368 {strides = array<i32>} : memref<1x8x128xf32, #tpu.memory_space<vmem>>, vector<1x8x128xf32>,
    } else {
    }
    return
  }
  func.func @transform_0(%arg0: i32, %arg1: i32) -> (i32, i32, i32) {
    %c0_i32 = arith.constant 0 : i32
    %c0_i32_0 = arith.constant 0 : i32
    return %arg1, %arg0, %c0_i32 : i32, i32, i32
  }
  func.func @transform_1(%arg0: i32, %arg1: i32) -> (i32, i32) {
    %c0_i32 = arith.constant 0 : i32
    %c0_i32_0 = arith.constant 0 : i32
    return %arg0, %c0_i32 : i32, i32
  }
  func.func @transform_2(%arg0: i32, %arg1: i32) -> (i32, i32) {
    %c0_i32 = arith.constant 0 : i32
    %c0_i32_0 = arith.constant 0 : i32
    %c0_i32_1 = arith.constant 0 : i32
    return %c0_i32, %c0_i32_0 : i32, i32
  }
  func.func @transform_3(%arg0: i32, %arg1: i32) -> (i32, i32) {
    %c0_i32 = arith.constant 0 : i32
    %c0_i32_0 = arith.constant 0 : i32
    %c0_i32_1 = arith.constant 0 : i32
    return %c0_i32, %c0_i32_0 : i32, i32
  }
  func.func @transform_4(%arg0: i32, %arg1: i32) -> (i32, i32, i32) {
    %c0_i32 = arith.constant 0 : i32
    %c0_i32_0 = arith.constant 0 : i32
    return %arg1, %arg0, %c0_i32 : i32, i32, i32
  }
  func.func @transform_5(%arg0: i32, %arg1: i32) -> (i32, i32, i32) {
    %c0_i32 = arith.constant 0 : i32
    %c0_i32_0 = arith.constant 0 : i32
    %c0_i32_1 = arith.constant 0 : i32
    return %c0_i32, %arg0, %c0_i32_0 : i32, i32, i32
  }
}

</mosaic_0001>

<llo_original>
// kernel: encoder_forward.1
$region0: #{encoder_forward.1}
  #allocation0 [shape = 'u32[]', space=smem, size = 0x4, offset = 0x4, fixed_abs, tag = 'smem constant byte address 0x4 - core index']
  #allocation1 [shape = 'u32[144,128]{1,0:T(1,128)}', space=vmem, size = 0x12000, scoped, tag = 'internal scratch']
  #allocation2 [shape = 'f32[8,128]{1,0:T(8,128)}', space=vmem, size = 0x1000, scoped, tag = 'scratch operand']
  %s0 = inlined_call_operand.vmem [shape: f32[8,8,384], index: 0, kind: input, shape index: {}]
  %s1 = inlined_call_operand.vmem [shape: s32[8,1], index: 1, kind: input, shape index: {}]
  %s2 = inlined_call_operand.vmem [shape: f32[128,384], index: 2, kind: input, shape index: {}]
  %s3 = inlined_call_operand.vmem [shape: f32[1,128], index: 3, kind: input, shape index: {}]
  %s4 = inlined_call_operand.vmem [shape: f32[8,8,128], index: 4, kind: output, shape index: {0}]
  %s5 = inlined_call_operand.vmem [shape: f32[1,8,128], index: 5, kind: output, shape index: {1}]
  %6 = xla_tuple %s4, %s5
  %s7 = sld [smem:[#allocation0]]
  $region42: #{encoder_forward.1} parent=0
    _
  %s9 = ssub.s32 1, %s7
  %s10 = scalar_select 0, %s9, %s7
  // Predicated region
  $region2: #{encoder_forward.1} parent=0 // pred_check
    _
  $region3: #{encoder_forward.1} parent=0 // pred_check_branch
    %12 = sbr.rel (0) target = $region5
  $region4: #{encoder_forward.1} parent=0 // pred_region
    _
  $region5: #{encoder_forward.1} parent=0 // pred_fallthru
    _
  // Predicated region
  $region6: #{encoder_forward.1} parent=0 // pred_check
    _
  $region7: #{encoder_forward.1} parent=0 // pred_check_branch
    %14 = sbr.rel (0) target = $region9
  $region8: #{encoder_forward.1} parent=0 // pred_region
    _
  $region9: #{encoder_forward.1} parent=0 // pred_fallthru
    _
  // Predicated region
  $region10: #{encoder_forward.1} parent=0 // pred_check
    _
  $region11: #{encoder_forward.1} parent=0 // pred_check_branch
    %16 = sbr.rel (0) target = $region13
  $region12: #{encoder_forward.1} parent=0 // pred_region
    _
  $region13: #{encoder_forward.1} parent=0 // pred_fallthru
    _
  // Predicated region
  $region14: #{encoder_forward.1} parent=0 // pred_check
    _
  $region15: #{encoder_forward.1} parent=0 // pred_check_branch
    %18 = sbr.rel (0) target = $region17
  $region16: #{encoder_forward.1} parent=0 // pred_region
    _
  $region17: #{encoder_forward.1} parent=0 // pred_fallthru
    _
  %p19 = scmp.eq.s32.totalorder 0, 0
  // Predicated region
  $region18: #{encoder_forward.1} parent=0 // pred_check
    %p20 = pneg %p19
  $region19: #{encoder_forward.1} parent=0 // pred_check_branch
    %22 = sbr.rel (%p20) target = $region21
  $region20: #{encoder_forward.1} parent=0 // pred_region
    %23 = vst [vmem:[#allocation2] sm:$0xff] 0.0
  $region21: #{encoder_forward.1} parent=0 // pred_fallthru
    _
  %v24 = vld [vmem:[%s2] sm:$0xff]
  %v25 = vld [vmem:[%s2 + $0x8] sm:$0xff]
  %v26 = vld [vmem:[%s2 + $0x10] sm:$0xff]
  %v27 = vld [vmem:[%s2 + $0x18] sm:$0xff]
  %v28 = vld [vmem:[%s2 + $0x20] sm:$0xff]
  %v29 = vld [vmem:[%s2 + $0x28] sm:$0xff]
  %v30 = vld [vmem:[%s2 + $0x30] sm:$0xff]
  %v31 = vld [vmem:[%s2 + $0x38] sm:$0xff]
  %v32 = vld [vmem:[%s2 + $0x40] sm:$0xff]
  %v33 = vld [vmem:[%s2 + $0x48] sm:$0xff]
  %v34 = vld [vmem:[%s2 + $0x50] sm:$0xff]
  %v35 = vld [vmem:[%s2 + $0x58] sm:$0xff]
  %v36 = vld [vmem:[%s2 + $0x60] sm:$0xff]
  %v37 = vld [vmem:[%s2 + $0x68] sm:$0xff]
  %v38 = vld [vmem:[%s2 + $0x70] sm:$0xff]
  %v39 = vld [vmem:[%s2 + $0x78] sm:$0xff]
  %v40 = vld [vmem:[%s2 + $0x80] sm:$0xff]
  %v41 = vld [vmem:[%s2 + $0x88] sm:$0xff]
  %v42 = vld [vmem:[%s2 + $0x90] sm:$0xff]
  %v43 = vld [vmem:[%s2 + $0x98] sm:$0xff]
  %v44 = vld [vmem:[%s2 + $0xa0] sm:$0xff]
  %v45 = vld [vmem:[%s2 + $0xa8] sm:$0xff]
  %v46 = vld [vmem:[%s2 + $0xb0] sm:$0xff]
  %v47 = vld [vmem:[%s2 + $0xb8] sm:$0xff]
  %v48 = vld [vmem:[%s2 + $0xc0] sm:$0xff]
  %v49 = vld [vmem:[%s2 + $0xc8] sm:$0xff]
  %v50 = vld [vmem:[%s2 + $0xd0] sm:$0xff]
  %v51 = vld [vmem:[%s2 + $0xd8] sm:$0xff]
  %v52 = vld [vmem:[%s2 + $0xe0] sm:$0xff]
  %v53 = vld [vmem:[%s2 + $0xe8] sm:$0xff]
  %v54 = vld [vmem:[%s2 + $0xf0] sm:$0xff]
  %v55 = vld [vmem:[%s2 + $0xf8] sm:$0xff]
  %v56 = vld [vmem:[%s2 + $0x100] sm:$0xff]
  %v57 = vld [vmem:[%s2 + $0x108] sm:$0xff]
  %v58 = vld [vmem:[%s2 + $0x110] sm:$0xff]
  %v59 = vld [vmem:[%s2 + $0x118] sm:$0xff]
  %v60 = vld [vmem:[%s2 + $0x120] sm:$0xff]
  %v61 = vld [vmem:[%s2 + $0x128] sm:$0xff]
  %v62 = vld [vmem:[%s2 + $0x130] sm:$0xff]
  %v63 = vld [vmem:[%s2 + $0x138] sm:$0xff]
  %v64 = vld [vmem:[%s2 + $0x140] sm:$0xff]
  %v65 = vld [vmem:[%s2 + $0x148] sm:$0xff]
  %v66 = vld [vmem:[%s2 + $0x150] sm:$0xff]
  %v67 = vld [vmem:[%s2 + $0x158] sm:$0xff]
  %v68 = vld [vmem:[%s2 + $0x160] sm:$0xff]
  %v69 = vld [vmem:[%s2 + $0x168] sm:$0xff]
  %v70 = vld [vmem:[%s2 + $0x170] sm:$0xff]
  %v71 = vld [vmem:[%s2 + $0x178] sm:$0xff]
  %v72 = vld [vmem:[%s1] sm:$0xff]
  %v73 = vld [vmem:[%s3] sm:$0x1]
  %v75 = vlaneseq
  %v76 = vshrl.u32 %v75, 7
  %v77 = vsub.s32 0, %v76
  %v78 = vrot.slane %v73, %v77
  %s80 = smul.u32 0, 8
  %v81 = vld [vmem:[#allocation2] sm:$0xff]
  %v82 = vld [vmem:[%s0] sm:$0xff]
  %v83 = vld [vmem:[%s0 + $0x8] sm:$0xff]
  %v84 = vld [vmem:[%s0 + $0x10] sm:$0xff]
  %85 = vmatprep.subr.mxu0 %v25
  %86 = vmatpush1.msra.mxu0 %v24
  %87 = vmatprep.subr.mxu0 %v28
  %88 = vmatpush1.msra.mxu0 %v27
  %89 = vmatprep.subr.mxu0 %v31
  %90 = vmatpush1.msra.mxu0 %v30
  %91 = vmatprep.subr.mxu0 %v34
  %92 = vmatpush1.msra.mxu0 %v33
  %93 = vmatprep.subr.mxu0 %v37
  %94 = vmatpush1.msra.mxu0 %v36
  %95 = vmatprep.subr.mxu0 %v40
  %96 = vmatpush1.msra.mxu0 %v39
  %97 = vmatprep.subr.mxu0 %v43
  %98 = vmatpush1.msra.mxu0 %v42
  %99 = vmatprep.subr.mxu0 %v46
  %100 = vmatpush1.msra.mxu0 %v45
  %101 = vmatprep.subr.mxu0 %v49
  %102 = vmatpush1.msra.mxu0 %v48
  %103 = vmatprep.subr.mxu0 %v52
  %104 = vmatpush1.msra.mxu0 %v51
  %105 = vmatprep.subr.mxu0 %v55
  %106 = vmatpush1.msra.mxu0 %v54
  %107 = vmatprep.subr.mxu0 %v58
  %108 = vmatpush1.msra.mxu0 %v57
  %109 = vmatprep.subr.mxu0 %v61
  %110 = vmatpush1.msra.mxu0 %v60
  %111 = vmatprep.subr.mxu0 %v64
  %112 = vmatpush1.msra.mxu0 %v63
  %113 = vmatprep.subr.mxu0 %v67
  %114 = vmatpush1.msra.mxu0 %v66
  %115 = vmatprep.subr.mxu0 %v70
  %116 = vmatpush1.msra.mxu0 %v69
  %117 = vmatprep.subr.mxu0 0.0
  %118 = vmatpush1.msra.mxu0 0.0
  %119 = vmatprep.subr.mxu0 0.0
  %120 = vmatpush1.msra.mxu0 0.0
  %121 = vmatprep.subr.mxu0 0.0
  %122 = vmatpush1.msra.mxu0 0.0
  %123 = vmatprep.subr.mxu0 0.0
  %124 = vmatpush1.msra.mxu0 0.0
  %125 = vmatprep.subr.mxu0 0.0
  %126 = vmatpush1.msra.mxu0 0.0
  %127 = vmatprep.subr.mxu0 0.0
  %128 = vmatpush1.msra.mxu0 0.0
  %129 = vmatprep.subr.mxu0 0.0
  %130 = vmatpush1.msra.mxu0 0.0
  %131 = vmatprep.subr.mxu0 0.0
  %132 = vmatpush1.msra.mxu0 0.0
  %133 = vmatprep.subr.mxu0 0.0
  %134 = vmatpush1.msra.mxu0 0.0
  %135 = vmatprep.subr.mxu0 0.0
  %136 = vmatpush1.msra.mxu0 0.0
  %137 = vmatprep.subr.mxu0 0.0
  %138 = vmatpush1.msra.mxu0 0.0
  %139 = vmatprep.subr.mxu0 0.0
  %140 = vmatpush1.msra.mxu0 0.0
  %141 = vmatprep.subr.mxu0 0.0
  %142 = vmatpush1.msra.mxu0 0.0
  %143 = vmatprep.subr.mxu0 0.0
  %144 = vmatpush1.msra.mxu0 0.0
  %145 = vmatprep.subr.mxu0 0.0
  %146 = vmatpush1.msra.mxu0 0.0
  %147 = vmatprep.subr.mxu0 0.0
  %148 = vmatpush1.msra.mxu0 0.0
  %149 = vmatprep.mubr.f32.mxu0 0.0
  %150 = vmatmul.mubr.f32.gmra.mrb[0].mxu0 %v81
  %v151 = vpop.f32.mrb[0].mxu0
  %v152 = vadd.f32 0.0, %v151
  %v153 = vpop.f32.mrb[0].mxu0
  %v154 = vadd.f32 0.0, %v153
  %155 = vdwg.mxu0
  %156 = vmatprep.subr.mxu0 0.0
  %157 = vmatpush1.msra.mxu0 %v26
  %158 = vmatprep.subr.mxu0 0.0
  %159 = vmatpush1.msra.mxu0 %v29
  %160 = vmatprep.subr.mxu0 0.0
  %161 = vmatpush1.msra.mxu0 %v32
  %162 = vmatprep.subr.mxu0 0.0
  %163 = vmatpush1.msra.mxu0 %v35
  %164 = vmatprep.subr.mxu0 0.0
  %165 = vmatpush1.msra.mxu0 %v38
  %166 = vmatprep.subr.mxu0 0.0
  %167 = vmatpush1.msra.mxu0 %v41
  %168 = vmatprep.subr.mxu0 0.0
  %169 = vmatpush1.msra.mxu0 %v44
  %170 = vmatprep.subr.mxu0 0.0
  %171 = vmatpush1.msra.mxu0 %v47
  %172 = vmatprep.subr.mxu0 0.0
  %173 = vmatpush1.msra.mxu0 %v50
  %174 = vmatprep.subr.mxu0 0.0
  %175 = vmatpush1.msra.mxu0 %v53
  %176 = vmatprep.subr.mxu0 0.0
  %177 = vmatpush1.msra.mxu0 %v56
  %178 = vmatprep.subr.mxu0 0.0
  %179 = vmatpush1.msra.mxu0 %v59
  %180 = vmatprep.subr.mxu0 0.0
  %181 = vmatpush1.msra.mxu0 %v62
  %182 = vmatprep.subr.mxu0 0.0
  %183 = vmatpush1.msra.mxu0 %v65
  %184 = vmatprep.subr.mxu0 0.0
  %185 = vmatpush1.msra.mxu0 %v68
  %186 = vmatprep.subr.mxu0 0.0
  %187 = vmatpush1.msra.mxu0 %v71
  %188 = vmatprep.subr.mxu0 0.0
  %189 = vmatpush1.msra.mxu0 0.0
  %190 = vmatprep.subr.mxu0 0.0
  %191 = vmatpush1.msra.mxu0 0.0
  %192 = vmatprep.subr.mxu0 0.0
  %193 = vmatpush1.msra.mxu0 0.0
  %194 = vmatprep.subr.mxu0 0.0
  %195 = vmatpush1.msra.mxu0 0.0
  %196 = vmatprep.subr.mxu0 0.0
  %197 = vmatpush1.msra.mxu0 0.0
  %198 = vmatprep.subr.mxu0 0.0
  %199 = vmatpush1.msra.mxu0 0.0
  %200 = vmatprep.subr.mxu0 0.0
  %201 = vmatpush1.msra.mxu0 0.0
  %202 = vmatprep.subr.mxu0 0.0
  %203 = vmatpush1.msra.mxu0 0.0
  %204 = vmatprep.subr.mxu0 0.0
  %205 = vmatpush1.msra.mxu0 0.0
  %206 = vmatprep.subr.mxu0 0.0
  %207 = vmatpush1.msra.mxu0 0.0
  %208 = vmatprep.subr.mxu0 0.0
  %209 = vmatpush1.msra.mxu0 0.0
  %210 = vmatprep.subr.mxu0 0.0
  %211 = vmatpush1.msra.mxu0 0.0
  %212 = vmatprep.subr.mxu0 0.0
  %213 = vmatpush1.msra.mxu0 0.0
  %214 = vmatprep.subr.mxu0 0.0
  %215 = vmatpush1.msra.mxu0 0.0
  %216 = vmatprep.subr.mxu0 0.0
  %217 = vmatpush1.msra.mxu0 0.0
  %218 = vmatprep.subr.mxu0 0.0
  %219 = vmatpush1.msra.mxu0 0.0
  %220 = vmatprep.mubr.f32.mxu0 0.0
  %221 = vmatmul.mubr.f32.gmra.mrb[0].mxu0 %v81
  %v222 = vpop.f32.mrb[0].mxu0
  %v223 = vadd.f32 0.0, %v222
  %v224 = vpop.f32.mrb[0].mxu0
  %225 = vdwg.mxu0
  %v226 = vadd.f32 %v82, %v152
  %v227 = vxor.u32 %v226, 2147483648
  %v228 = vmul.f32 %v227, 1.442695
  %v229 = vpow.pop %v228
  %v230 = vadd.f32 %v229, 1.0
  %v231 = vrcp.pop %v230
  %v232 = vmul.f32 1.0, %v231
  %v233 = vadd.f32 %v83, %v154
  %v234 = vxor.u32 %v233, 2147483648
  %v235 = vmul.f32 %v234, 1.442695
  %v236 = vpow.pop %v235
  %v237 = vadd.f32 %v236, 1.0
  %v238 = vrcp.pop %v237
  %v239 = vmul.f32 1.0, %v238
  %v240 = vadd.f32 %v223, %v78
  %v241 = vmul.f32 %v232, %v240
  %v242 = vadd.f32 %v84, %v241
  %v243 = vtanh.pop %v242
  %v244 = vsub.f32 %v81, %v243
  %v245 = vmul.f32 %v239, %v244
  %v246 = vadd.f32 %v243, %v245
  %v247 = vstv %s80
  %vm248 = vcmp.lt.s32.totalorder %v247, %v72
  %v249 = vsel %vm248, 1, 0
  %v250 = vcvt.s32.f32 %v249
  %v251 = vsub.f32 %v246, %v81
  %253 = vset.pattern.permute.xlu0 0
  %254 = vperm.xlu0 %253, %v250
  %v255 = vpop.permute.xlu0 %254
  %v257 = vmul.f32 %v255, %v251
  %v258 = vadd.f32 %v81, %v257
  %v259 = vmul.f32 %v255, %v258
  %260 = vst [vmem:[%s4] sm:$0xff] %v259
  %s261 = scalar_lea.vmem %s0, 24
  %v262 = vld [vmem:[%s261] sm:$0xff]
  %v263 = vld [vmem:[%s261 + $0x8] sm:$0xff]
  %v264 = vld [vmem:[%s261 + $0x10] sm:$0xff]
  %265 = vmatprep.subr.mxu0 %v25
  %266 = vmatpush1.msra.mxu0 %v24
  %267 = vmatprep.subr.mxu0 %v28
  %268 = vmatpush1.msra.mxu0 %v27
  %269 = vmatprep.subr.mxu0 %v31
  %270 = vmatpush1.msra.mxu0 %v30
  %271 = vmatprep.subr.mxu0 %v34
  %272 = vmatpush1.msra.mxu0 %v33
  %273 = vmatprep.subr.mxu0 %v37
  %274 = vmatpush1.msra.mxu0 %v36
  %275 = vmatprep.subr.mxu0 %v40
  %276 = vmatpush1.msra.mxu0 %v39
  %277 = vmatprep.subr.mxu0 %v43
  %278 = vmatpush1.msra.mxu0 %v42
  %279 = vmatprep.subr.mxu0 %v46
  %280 = vmatpush1.msra.mxu0 %v45
  %281 = vmatprep.subr.mxu0 %v49
  %282 = vmatpush1.msra.mxu0 %v48
  %283 = vmatprep.subr.mxu0 %v52
  %284 = vmatpush1.msra.mxu0 %v51
  %285 = vmatprep.subr.mxu0 %v55
  %286 = vmatpush1.msra.mxu0 %v54
  %287 = vmatprep.subr.mxu0 %v58
  %288 = vmatpush1.msra.mxu0 %v57
  %289 = vmatprep.subr.mxu0 %v61
  %290 = vmatpush1.msra.mxu0 %v60
  %291 = vmatprep.subr.mxu0 %v64
  %292 = vmatpush1.msra.mxu0 %v63
  %293 = vmatprep.subr.mxu0 %v67
  %294 = vmatpush1.msra.mxu0 %v66
  %295 = vmatprep.subr.mxu0 %v70
  %296 = vmatpush1.msra.mxu0 %v69
  %297 = vmatprep.subr.mxu0 0.0
  %298 = vmatpush1.msra.mxu0 0.0
  %299 = vmatprep.subr.mxu0 0.0
  %300 = vmatpush1.msra.mxu0 0.0
  %301 = vmatprep.subr.mxu0 0.0
  %302 = vmatpush1.msra.mxu0 0.0
  %303 = vmatprep.subr.mxu0 0.0
  %304 = vmatpush1.msra.mxu0 0.0
  %305 = vmatprep.subr.mxu0 0.0
  %306 = vmatpush1.msra.mxu0 0.0
  %307 = vmatprep.subr.mxu0 0.0
  %308 = vmatpush1.msra.mxu0 0.0
  %309 = vmatprep.subr.mxu0 0.0
  %310 = vmatpush1.msra.mxu0 0.0
  %311 = vmatprep.subr.mxu0 0.0
  %312 = vmatpush1.msra.mxu0 0.0
  %313 = vmatprep.subr.mxu0 0.0
  %314 = vmatpush1.msra.mxu0 0.0
  %315 = vmatprep.subr.mxu0 0.0
  %316 = vmatpush1.msra.mxu0 0.0
  %317 = vmatprep.subr.mxu0 0.0
  %318 = vmatpush1.msra.mxu0 0.0
  %319 = vmatprep.subr.mxu0 0.0
  %320 = vmatpush1.msra.mxu0 0.0
  %321 = vmatprep.subr.mxu0 0.0
  %322 = vmatpush1.msra.mxu0 0.0
  %323 = vmatprep.subr.mxu0 0.0
  %324 = vmatpush1.msra.mxu0 0.0
  %325 = vmatprep.subr.mxu0 0.0
  %326 = vmatpush1.msra.mxu0 0.0
  %327 = vmatprep.subr.mxu0 0.0
  %328 = vmatpush1.msra.mxu0 0.0
  %329 = vmatprep.mubr.f32.mxu0 0.0
  %330 = vmatmul.mubr.f32.gmra.mrb[0].mxu0 %v258
  %v331 = vpop.f32.mrb[0].mxu0
  %v332 = vadd.f32 0.0, %v331
  %v333 = vpop.f32.mrb[0].mxu0
  %v334 = vadd.f32 0.0, %v333
  %335 = vdwg.mxu0
  %336 = vmatprep.subr.mxu0 0.0
  %337 = vmatpush1.msra.mxu0 %v26
  %338 = vmatprep.subr.mxu0 0.0
  %339 = vmatpush1.msra.mxu0 %v29
  %340 = vmatprep.subr.mxu0 0.0
  %341 = vmatpush1.msra.mxu0 %v32
  %342 = vmatprep.subr.mxu0 0.0
  %343 = vmatpush1.msra.mxu0 %v35
  %344 = vmatprep.subr.mxu0 0.0
  %345 = vmatpush1.msra.mxu0 %v38
  %346 = vmatprep.subr.mxu0 0.0
  %347 = vmatpush1.msra.mxu0 %v41
  %348 = vmatprep.subr.mxu0 0.0
  %349 = vmatpush1.msra.mxu0 %v44
  %350 = vmatprep.subr.mxu0 0.0
  %351 = vmatpush1.msra.mxu0 %v47
  %352 = vmatprep.subr.mxu0 0.0
  %353 = vmatpush1.msra.mxu0 %v50
  %354 = vmatprep.subr.mxu0 0.0
  %355 = vmatpush1.msra.mxu0 %v53
  %356 = vmatprep.subr.mxu0 0.0
  %357 = vmatpush1.msra.mxu0 %v56
  %358 = vmatprep.subr.mxu0 0.0
  %359 = vmatpush1.msra.mxu0 %v59
  %360 = vmatprep.subr.mxu0 0.0
  %361 = vmatpush1.msra.mxu0 %v62
  %362 = vmatprep.subr.mxu0 0.0
  %363 = vmatpush1.msra.mxu0 %v65
  %364 = vmatprep.subr.mxu0 0.0
  %365 = vmatpush1.msra.mxu0 %v68
  %366 = vmatprep.subr.mxu0 0.0
  %367 = vmatpush1.msra.mxu0 %v71
  %368 = vmatprep.subr.mxu0 0.0
  %369 = vmatpush1.msra.mxu0 0.0
  %370 = vmatprep.subr.mxu0 0.0
  %371 = vmatpush1.msra.mxu0 0.0
  %372 = vmatprep.subr.mxu0 0.0
  %373 = vmatpush1.msra.mxu0 0.0
  %374 = vmatprep.subr.mxu0 0.0
  %375 = vmatpush1.msra.mxu0 0.0
  %376 = vmatprep.subr.mxu0 0.0
  %377 = vmatpush1.msra.mxu0 0.0
  %378 = vmatprep.subr.mxu0 0.0
  %379 = vmatpush1.msra.mxu0 0.0
  %380 = vmatprep.subr.mxu0 0.0
  %381 = vmatpush1.msra.mxu0 0.0
  %382 = vmatprep.subr.mxu0 0.0
  %383 = vmatpush1.msra.mxu0 0.0
  %384 = vmatprep.subr.mxu0 0.0
  %385 = vmatpush1.msra.mxu0 0.0
  %386 = vmatprep.subr.mxu0 0.0
  %387 = vmatpush1.msra.mxu0 0.0
  %388 = vmatprep.subr.mxu0 0.0
  %389 = vmatpush1.msra.mxu0 0.0
  %390 = vmatprep.subr.mxu0 0.0
  %391 = vmatpush1.msra.mxu0 0.0
  %392 = vmatprep.subr.mxu0 0.0
  %393 = vmatpush1.msra.mxu0 0.0
  %394 = vmatprep.subr.mxu0 0.0
  %395 = vmatpush1.msra.mxu0 0.0
  %396 = vmatprep.subr.mxu0 0.0
  %397 = vmatpush1.msra.mxu0 0.0
  %398 = vmatprep.subr.mxu0 0.0
  %399 = vmatpush1.msra.mxu0 0.0
  %400 = vmatprep.mubr.f32.mxu0 0.0
  %401 = vmatmul.mubr.f32.gmra.mrb[0].mxu0 %v258
  %v402 = vpop.f32.mrb[0].mxu0
  %v403 = vadd.f32 0.0, %v402
  %v404 = vpop.f32.mrb[0].mxu0
  %405 = vdwg.mxu0
  %v406 = vadd.f32 %v262, %v332
  %v407 = vxor.u32 %v406, 2147483648
  %v408 = vmul.f32 %v407, 1.442695
  %v409 = vpow.pop %v408
  %v410 = vadd.f32 %v409, 1.0
  %v411 = vrcp.pop %v410
  %v412 = vmul.f32 1.0, %v411
  %v413 = vadd.f32 %v263, %v334
  %v414 = vxor.u32 %v413, 2147483648
  %v415 = vmul.f32 %v414, 1.442695
  %v416 = vpow.pop %v415
  %v417 = vadd.f32 %v416, 1.0
  %v418 = vrcp.pop %v417
  %v419 = vmul.f32 1.0, %v418
  %v420 = vadd.f32 %v403, %v78
  %v421 = vmul.f32 %v412, %v420
  %v422 = vadd.f32 %v264, %v421
  %v423 = vtanh.pop %v422
  %v424 = vsub.f32 %v258, %v423
  %v425 = vmul.f32 %v419, %v424
  %v426 = vadd.f32 %v423, %v425
  %s427 = sadd.s32 %s80, 1
  %v428 = vstv %s427
  %vm429 = vcmp.lt.s32.totalorder %v428, %v72
  %v430 = vsel %vm429, 1, 0
  %v431 = vcvt.s32.f32 %v430
  %v432 = vsub.f32 %v426, %v258
  %434 = vset.pattern.permute.xlu0 0
  %435 = vperm.xlu0 %434, %v431
  %v436 = vpop.permute.xlu0 %435
  %v438 = vmul.f32 %v436, %v432
  %v439 = vadd.f32 %v258, %v438
  %v440 = vmul.f32 %v436, %v439
  %s441 = scalar_lea.vmem %s4, 8
  %442 = vst [vmem:[%s441] sm:$0xff] %v440
  %s443 = scalar_lea.vmem %s0, 48
  %v444 = vld [vmem:[%s443] sm:$0xff]
  %v445 = vld [vmem:[%s443 + $0x8] sm:$0xff]
  %v446 = vld [vmem:[%s443 + $0x10] sm:$0xff]
  %447 = vmatprep.subr.mxu0 %v25
  %448 = vmatpush1.msra.mxu0 %v24
  %449 = vmatprep.subr.mxu0 %v28
  %450 = vmatpush1.msra.mxu0 %v27
  %451 = vmatprep.subr.mxu0 %v31
  %452 = vmatpush1.msra.mxu0 %v30
  %453 = vmatprep.subr.mxu0 %v34
  %454 = vmatpush1.msra.mxu0 %v33
  %455 = vmatprep.subr.mxu0 %v37
  %456 = vmatpush1.msra.mxu0 %v36
  %457 = vmatprep.subr.mxu0 %v40
  %458 = vmatpush1.msra.mxu0 %v39
  %459 = vmatprep.subr.mxu0 %v43
  %460 = vmatpush1.msra.mxu0 %v42
  %461 = vmatprep.subr.mxu0 %v46
  %462 = vmatpush1.msra.mxu0 %v45
  %463 = vmatprep.subr.mxu0 %v49
  %464 = vmatpush1.msra.mxu0 %v48
  %465 = vmatprep.subr.mxu0 %v52
  %466 = vmatpush1.msra.mxu0 %v51
  %467 = vmatprep.subr.mxu0 %v55
  %468 = vmatpush1.msra.mxu0 %v54
  %469 = vmatprep.subr.mxu0 %v58
  %470 = vmatpush1.msra.mxu0 %v57
  %471 = vmatprep.subr.mxu0 %v61
  %472 = vmatpush1.msra.mxu0 %v60
  %473 = vmatprep.subr.mxu0 %v64
  %474 = vmatpush1.msra.mxu0 %v63
  %475 = vmatprep.subr.mxu0 %v67
  %476 = vmatpush1.msra.mxu0 %v66
  %477 = vmatprep.subr.mxu0 %v70
  %478 = vmatpush1.msra.mxu0 %v69
  %479 = vmatprep.subr.mxu0 0.0
  %480 = vmatpush1.msra.mxu0 0.0
  %481 = vmatprep.subr.mxu0 0.0
  %482 = vmatpush1.msra.mxu0 0.0
  %483 = vmatprep.subr.mxu0 0.0
  %484 = vmatpush1.msra.mxu0 0.0
  %485 = vmatprep.subr.mxu0 0.0
  %486 = vmatpush1.msra.mxu0 0.0
  %487 = vmatprep.subr.mxu0 0.0
  %488 = vmatpush1.msra.mxu0 0.0
  %489 = vmatprep.subr.mxu0 0.0
  %490 = vmatpush1.msra.mxu0 0.0
  %491 = vmatprep.subr.mxu0 0.0
  %492 = vmatpush1.msra.mxu0 0.0
  %493 = vmatprep.subr.mxu0 0.0
  %494 = vmatpush1.msra.mxu0 0.0
  %495 = vmatprep.subr.mxu0 0.0
  %496 = vmatpush1.msra.mxu0 0.0
  %497 = vmatprep.subr.mxu0 0.0
  %498 = vmatpush1.msra.mxu0 0.0
  %499 = vmatprep.subr.mxu0 0.0
  %500 = vmatpush1.msra.mxu0 0.0
  %501 = vmatprep.subr.mxu0 0.0
  %502 = vmatpush1.msra.mxu0 0.0
  %503 = vmatprep.subr.mxu0 0.0
  %504 = vmatpush1.msra.mxu0 0.0
  %505 = vmatprep.subr.mxu0 0.0
  %506 = vmatpush1.msra.mxu0 0.0
  %507 = vmatprep.subr.mxu0 0.0
  %508 = vmatpush1.msra.mxu0 0.0
  %509 = vmatprep.subr.mxu0 0.0
  %510 = vmatpush1.msra.mxu0 0.0
  %511 = vmatprep.mubr.f32.mxu0 0.0
  %512 = vmatmul.mubr.f32.gmra.mrb[0].mxu0 %v439
  %v513 = vpop.f32.mrb[0].mxu0
  %v514 = vadd.f32 0.0, %v513
  %v515 = vpop.f32.mrb[0].mxu0
  %v516 = vadd.f32 0.0, %v515
  %517 = vdwg.mxu0
  %518 = vmatprep.subr.mxu0 0.0
  %519 = vmatpush1.msra.mxu0 %v26
  %520 = vmatprep.subr.mxu0 0.0
  %521 = vmatpush1.msra.mxu0 %v29
  %522 = vmatprep.subr.mxu0 0.0
  %523 = vmatpush1.msra.mxu0 %v32
  %524 = vmatprep.subr.mxu0 0.0
  %525 = vmatpush1.msra.mxu0 %v35
  %526 = vmatprep.subr.mxu0 0.0
  %527 = vmatpush1.msra.mxu0 %v38
  %528 = vmatprep.subr.mxu0 0.0
  %529 = vmatpush1.msra.mxu0 %v41
  %530 = vmatprep.subr.mxu0 0.0
  %531 = vmatpush1.msra.mxu0 %v44
  %532 = vmatprep.subr.mxu0 0.0
  %533 = vmatpush1.msra.mxu0 %v47
  %534 = vmatprep.subr.mxu0 0.0
  %535 = vmatpush1.msra.mxu0 %v50
  %536 = vmatprep.subr.mxu0 0.0
  %537 = vmatpush1.msra.mxu0 %v53
  %538 = vmatprep.subr.mxu0 0.0
  %539 = vmatpush1.msra.mxu0 %v56
  %540 = vmatprep.subr.mxu0 0.0
  %541 = vmatpush1.msra.mxu0 %v59
  %542 = vmatprep.subr.mxu0 0.0
  %543 = vmatpush1.msra.mxu0 %v62
  %544 = vmatprep.subr.mxu0 0.0
  %545 = vmatpush1.msra.mxu0 %v65
  %546 = vmatprep.subr.mxu0 0.0
  %547 = vmatpush1.msra.mxu0 %v68
  %548 = vmatprep.subr.mxu0 0.0
  %549 = vmatpush1.msra.mxu0 %v71
  %550 = vmatprep.subr.mxu0 0.0
  %551 = vmatpush1.msra.mxu0 0.0
  %552 = vmatprep.subr.mxu0 0.0
  %553 = vmatpush1.msra.mxu0 0.0
  %554 = vmatprep.subr.mxu0 0.0
  %555 = vmatpush1.msra.mxu0 0.0
  %556 = vmatprep.subr.mxu0 0.0
  %557 = vmatpush1.msra.mxu0 0.0
  %558 = vmatprep.subr.mxu0 0.0
  %559 = vmatpush1.msra.mxu0 0.0
  %560 = vmatprep.subr.mxu0 0.0
  %561 = vmatpush1.msra.mxu0 0.0
  %562 = vmatprep.subr.mxu0 0.0
  %563 = vmatpush1.msra.mxu0 0.0
  %564 = vmatprep.subr.mxu0 0.0
  %565 = vmatpush1.msra.mxu0 0.0
  %566 = vmatprep.subr.mxu0 0.0
  %567 = vmatpush1.msra.mxu0 0.0
  %568 = vmatprep.subr.mxu0 0.0
  %569 = vmatpush1.msra.mxu0 0.0
  %570 = vmatprep.subr.mxu0 0.0
  %571 = vmatpush1.msra.mxu0 0.0
  %572 = vmatprep.subr.mxu0 0.0
  %573 = vmatpush1.msra.mxu0 0.0
  %574 = vmatprep.subr.mxu0 0.0
  %575 = vmatpush1.msra.mxu0 0.0
  %576 = vmatprep.subr.mxu0 0.0
  %577 = vmatpush1.msra.mxu0 0.0
  %578 = vmatprep.subr.mxu0 0.0
  %579 = vmatpush1.msra.mxu0 0.0
  %580 = vmatprep.subr.mxu0 0.0
  %581 = vmatpush1.msra.mxu0 0.0
  %582 = vmatprep.mubr.f32.mxu0 0.0
  %583 = vmatmul.mubr.f32.gmra.mrb[0].mxu0 %v439
  %v584 = vpop.f32.mrb[0].mxu0
  %v585 = vadd.f32 0.0, %v584
  %v586 = vpop.f32.mrb[0].mxu0
  %587 = vdwg.mxu0
  %v588 = vadd.f32 %v444, %v514
  %v589 = vxor.u32 %v588, 2147483648
  %v590 = vmul.f32 %v589, 1.442695
  %v591 = vpow.pop %v590
  %v592 = vadd.f32 %v591, 1.0
  %v593 = vrcp.pop %v592
  %v594 = vmul.f32 1.0, %v593
  %v595 = vadd.f32 %v445, %v516
  %v596 = vxor.u32 %v595, 2147483648
  %v597 = vmul.f32 %v596, 1.442695
  %v598 = vpow.pop %v597
  %v599 = vadd.f32 %v598, 1.0
  %v600 = vrcp.pop %v599
  %v601 = vmul.f32 1.0, %v600
  %v602 = vadd.f32 %v585, %v78
  %v603 = vmul.f32 %v594, %v602
  %v604 = vadd.f32 %v446, %v603
  %v605 = vtanh.pop %v604
  %v606 = vsub.f32 %v439, %v605
  %v607 = vmul.f32 %v601, %v606
  %v608 = vadd.f32 %v605, %v607
  %s609 = sadd.s32 %s80, 2
  %v610 = vstv %s609
  %vm611 = vcmp.lt.s32.totalorder %v610, %v72
  %v612 = vsel %vm611, 1, 0
  %v613 = vcvt.s32.f32 %v612
  %v614 = vsub.f32 %v608, %v439
  %616 = vset.pattern.permute.xlu0 0
  %617 = vperm.xlu0 %616, %v613
  %v618 = vpop.permute.xlu0 %617
  %v620 = vmul.f32 %v618, %v614
  %v621 = vadd.f32 %v439, %v620
  %v622 = vmul.f32 %v618, %v621
  %s623 = scalar_lea.vmem %s4, 16
  %624 = vst [vmem:[%s623] sm:$0xff] %v622
  %s625 = scalar_lea.vmem %s0, 72
  %v626 = vld [vmem:[%s625] sm:$0xff]
  %v627 = vld [vmem:[%s625 + $0x8] sm:$0xff]
  %v628 = vld [vmem:[%s625 + $0x10] sm:$0xff]
  %629 = vmatprep.subr.mxu0 %v25
  %630 = vmatpush1.msra.mxu0 %v24
  %631 = vmatprep.subr.mxu0 %v28
  %632 = vmatpush1.msra.mxu0 %v27
  %633 = vmatprep.subr.mxu0 %v31
  %634 = vmatpush1.msra.mxu0 %v30
  %635 = vmatprep.subr.mxu0 %v34
  %636 = vmatpush1.msra.mxu0 %v33
  %637 = vmatprep.subr.mxu0 %v37
  %638 = vmatpush1.msra.mxu0 %v36
  %639 = vmatprep.subr.mxu0 %v40
  %640 = vmatpush1.msra.mxu0 %v39
  %641 = vmatprep.subr.mxu0 %v43
  %642 = vmatpush1.msra.mxu0 %v42
  %643 = vmatprep.subr.mxu0 %v46
  %644 = vmatpush1.msra.mxu0 %v45
  %645 = vmatprep.subr.mxu0 %v49
  %646 = vmatpush1.msra.mxu0 %v48
  %647 = vmatprep.subr.mxu0 %v52
  %648 = vmatpush1.msra.mxu0 %v51
  %649 = vmatprep.subr.mxu0 %v55
  %650 = vmatpush1.msra.mxu0 %v54
  %651 = vmatprep.subr.mxu0 %v58
  %652 = vmatpush1.msra.mxu0 %v57
  %653 = vmatprep.subr.mxu0 %v61
  %654 = vmatpush1.msra.mxu0 %v60
  %655 = vmatprep.subr.mxu0 %v64
  %656 = vmatpush1.msra.mxu0 %v63
  %657 = vmatprep.subr.mxu0 %v67
  %658 = vmatpush1.msra.mxu0 %v66
  %659 = vmatprep.subr.mxu0 %v70
  %660 = vmatpush1.msra.mxu0 %v69
  %661 = vmatprep.subr.mxu0 0.0
  %662 = vmatpush1.msra.mxu0 0.0
  %663 = vmatprep.subr.mxu0 0.0
  %664 = vmatpush1.msra.mxu0 0.0
  %665 = vmatprep.subr.mxu0 0.0
  %666 = vmatpush1.msra.mxu0 0.0
  %667 = vmatprep.subr.mxu0 0.0
  %668 = vmatpush1.msra.mxu0 0.0
  %669 = vmatprep.subr.mxu0 0.0
  %670 = vmatpush1.msra.mxu0 0.0
  %671 = vmatprep.subr.mxu0 0.0
  %672 = vmatpush1.msra.mxu0 0.0
  %673 = vmatprep.subr.mxu0 0.0
  %674 = vmatpush1.msra.mxu0 0.0
  %675 = vmatprep.subr.mxu0 0.0
  %676 = vmatpush1.msra.mxu0 0.0
  %677 = vmatprep.subr.mxu0 0.0
  %678 = vmatpush1.msra.mxu0 0.0
  %679 = vmatprep.subr.mxu0 0.0
  %680 = vmatpush1.msra.mxu0 0.0
  %681 = vmatprep.subr.mxu0 0.0
  %682 = vmatpush1.msra.mxu0 0.0
  %683 = vmatprep.subr.mxu0 0.0
  %684 = vmatpush1.msra.mxu0 0.0
  %685 = vmatprep.subr.mxu0 0.0
  %686 = vmatpush1.msra.mxu0 0.0
  %687 = vmatprep.subr.mxu0 0.0
  %688 = vmatpush1.msra.mxu0 0.0
  %689 = vmatprep.subr.mxu0 0.0
  %690 = vmatpush1.msra.mxu0 0.0
  %691 = vmatprep.subr.mxu0 0.0
  %692 = vmatpush1.msra.mxu0 0.0
  %693 = vmatprep.mubr.f32.mxu0 0.0
  %694 = vmatmul.mubr.f32.gmra.mrb[0].mxu0 %v621
  %v695 = vpop.f32.mrb[0].mxu0
  %v696 = vadd.f32 0.0, %v695
  %v697 = vpop.f32.mrb[0].mxu0
  %v698 = vadd.f32 0.0, %v697
  %699 = vdwg.mxu0
  %700 = vmatprep.subr.mxu0 0.0
  %701 = vmatpush1.msra.mxu0 %v26
  %702 = vmatprep.subr.mxu0 0.0
  %703 = vmatpush1.msra.mxu0 %v29
  %704 = vmatprep.subr.mxu0 0.0
  %705 = vmatpush1.msra.mxu0 %v32
  %706 = vmatprep.subr.mxu0 0.0
  %707 = vmatpush1.msra.mxu0 %v35
  %708 = vmatprep.subr.mxu0 0.0
  %709 = vmatpush1.msra.mxu0 %v38
  %710 = vmatprep.subr.mxu0 0.0
  %711 = vmatpush1.msra.mxu0 %v41
  %712 = vmatprep.subr.mxu0 0.0
  %713 = vmatpush1.msra.mxu0 %v44
  %714 = vmatprep.subr.mxu0 0.0
  %715 = vmatpush1.msra.mxu0 %v47
  %716 = vmatprep.subr.mxu0 0.0
  %717 = vmatpush1.msra.mxu0 %v50
  %718 = vmatprep.subr.mxu0 0.0
  %719 = vmatpush1.msra.mxu0 %v53
  %720 = vmatprep.subr.mxu0 0.0
  %721 = vmatpush1.msra.mxu0 %v56
  %722 = vmatprep.subr.mxu0 0.0
  %723 = vmatpush1.msra.mxu0 %v59
  %724 = vmatprep.subr.mxu0 0.0
  %725 = vmatpush1.msra.mxu0 %v62
  %726 = vmatprep.subr.mxu0 0.0
  %727 = vmatpush1.msra.mxu0 %v65
  %728 = vmatprep.subr.mxu0 0.0
  %729 = vmatpush1.msra.mxu0 %v68
  %730 = vmatprep.subr.mxu0 0.0
  %731 = vmatpush1.msra.mxu0 %v71
  %732 = vmatprep.subr.mxu0 0.0
  %733 = vmatpush1.msra.mxu0 0.0
  %734 = vmatprep.subr.mxu0 0.0
  %735 = vmatpush1.msra.mxu0 0.0
  %736 = vmatprep.subr.mxu0 0.0
  %737 = vmatpush1.msra.mxu0 0.0
  %738 = vmatprep.subr.mxu0 0.0
  %739 = vmatpush1.msra.mxu0 0.0
  %740 = vmatprep.subr.mxu0 0.0
  %741 = vmatpush1.msra.mxu0 0.0
  %742 = vmatprep.subr.mxu0 0.0
  %743 = vmatpush1.msra.mxu0 0.0
  %744 = vmatprep.subr.mxu0 0.0
  %745 = vmatpush1.msra.mxu0 0.0
  %746 = vmatprep.subr.mxu0 0.0
  %747 = vmatpush1.msra.mxu0 0.0
  %748 = vmatprep.subr.mxu0 0.0
  %749 = vmatpush1.msra.mxu0 0.0
  %750 = vmatprep.subr.mxu0 0.0
  %751 = vmatpush1.msra.mxu0 0.0
  %752 = vmatprep.subr.mxu0 0.0
  %753 = vmatpush1.msra.mxu0 0.0
  %754 = vmatprep.subr.mxu0 0.0
  %755 = vmatpush1.msra.mxu0 0.0
  %756 = vmatprep.subr.mxu0 0.0
  %757 = vmatpush1.msra.mxu0 0.0
  %758 = vmatprep.subr.mxu0 0.0
  %759 = vmatpush1.msra.mxu0 0.0
  %760 = vmatprep.subr.mxu0 0.0
  %761 = vmatpush1.msra.mxu0 0.0
  %762 = vmatprep.subr.mxu0 0.0
  %763 = vmatpush1.msra.mxu0 0.0
  %764 = vmatprep.mubr.f32.mxu0 0.0
  %765 = vmatmul.mubr.f32.gmra.mrb[0].mxu0 %v621
  %v766 = vpop.f32.mrb[0].mxu0
  %v767 = vadd.f32 0.0, %v766
  %v768 = vpop.f32.mrb[0].mxu0
  %769 = vdwg.mxu0
  %v770 = vadd.f32 %v626, %v696
  %v771 = vxor.u32 %v770, 2147483648
  %v772 = vmul.f32 %v771, 1.442695
  %v773 = vpow.pop %v772
  %v774 = vadd.f32 %v773, 1.0
  %v775 = vrcp.pop %v774
  %v776 = vmul.f32 1.0, %v775
  %v777 = vadd.f32 %v627, %v698
  %v778 = vxor.u32 %v777, 2147483648
  %v779 = vmul.f32 %v778, 1.442695
  %v780 = vpow.pop %v779
  %v781 = vadd.f32 %v780, 1.0
  %v782 = vrcp.pop %v781
  %v783 = vmul.f32 1.0, %v782
  %v784 = vadd.f32 %v767, %v78
  %v785 = vmul.f32 %v776, %v784
  %v786 = vadd.f32 %v628, %v785
  %v787 = vtanh.pop %v786
  %v788 = vsub.f32 %v621, %v787
  %v789 = vmul.f32 %v783, %v788
  %v790 = vadd.f32 %v787, %v789
  %s791 = sadd.s32 %s80, 3
  %v792 = vstv %s791
  %vm793 = vcmp.lt.s32.totalorder %v792, %v72
  %v794 = vsel %vm793, 1, 0
  %v795 = vcvt.s32.f32 %v794
  %v796 = vsub.f32 %v790, %v621
  %798 = vset.pattern.permute.xlu0 0
  %799 = vperm.xlu0 %798, %v795
  %v800 = vpop.permute.xlu0 %799
  %v802 = vmul.f32 %v800, %v796
  %v803 = vadd.f32 %v621, %v802
  %v804 = vmul.f32 %v800, %v803
  %s805 = scalar_lea.vmem %s4, 24
  %806 = vst [vmem:[%s805] sm:$0xff] %v804
  %s807 = scalar_lea.vmem %s0, 96
  %v808 = vld [vmem:[%s807] sm:$0xff]
  %v809 = vld [vmem:[%s807 + $0x8] sm:$0xff]
  %v810 = vld [vmem:[%s807 + $0x10] sm:$0xff]
  %811 = vmatprep.subr.mxu0 %v25
  %812 = vmatpush1.msra.mxu0 %v24
  %813 = vmatprep.subr.mxu0 %v28
  %814 = vmatpush1.msra.mxu0 %v27
  %815 = vmatprep.subr.mxu0 %v31
  %816 = vmatpush1.msra.mxu0 %v30
  %817 = vmatprep.subr.mxu0 %v34
  %818 = vmatpush1.msra.mxu0 %v33
  %819 = vmatprep.subr.mxu0 %v37
  %820 = vmatpush1.msra.mxu0 %v36
  %821 = vmatprep.subr.mxu0 %v40
  %822 = vmatpush1.msra.mxu0 %v39
  %823 = vmatprep.subr.mxu0 %v43
  %824 = vmatpush1.msra.mxu0 %v42
  %825 = vmatprep.subr.mxu0 %v46
  %826 = vmatpush1.msra.mxu0 %v45
  %827 = vmatprep.subr.mxu0 %v49
  %828 = vmatpush1.msra.mxu0 %v48
  %829 = vmatprep.subr.mxu0 %v52
  %830 = vmatpush1.msra.mxu0 %v51
  %831 = vmatprep.subr.mxu0 %v55
  %832 = vmatpush1.msra.mxu0 %v54
  %833 = vmatprep.subr.mxu0 %v58
  %834 = vmatpush1.msra.mxu0 %v57
  %835 = vmatprep.subr.mxu0 %v61
  %836 = vmatpush1.msra.mxu0 %v60
  %837 = vmatprep.subr.mxu0 %v64
  %838 = vmatpush1.msra.mxu0 %v63
  %839 = vmatprep.subr.mxu0 %v67
  %840 = vmatpush1.msra.mxu0 %v66
  %841 = vmatprep.subr.mxu0 %v70
  %842 = vmatpush1.msra.mxu0 %v69
  %843 = vmatprep.subr.mxu0 0.0
  %844 = vmatpush1.msra.mxu0 0.0
  %845 = vmatprep.subr.mxu0 0.0
  %846 = vmatpush1.msra.mxu0 0.0
  %847 = vmatprep.subr.mxu0 0.0
  %848 = vmatpush1.msra.mxu0 0.0
  %849 = vmatprep.subr.mxu0 0.0
  %850 = vmatpush1.msra.mxu0 0.0
  %851 = vmatprep.subr.mxu0 0.0
  %852 = vmatpush1.msra.mxu0 0.0
  %853 = vmatprep.subr.mxu0 0.0
  %854 = vmatpush1.msra.mxu0 0.0
  %855 = vmatprep.subr.mxu0 0.0
  %856 = vmatpush1.msra.mxu0 0.0
  %857 = vmatprep.subr.mxu0 0.0
  %858 = vmatpush1.msra.mxu0 0.0
  %859 = vmatprep.subr.mxu0 0.0
  %860 = vmatpush1.msra.mxu0 0.0
  %861 = vmatprep.subr.mxu0 0.0
  %862 = vmatpush1.msra.mxu0 0.0
  %863 = vmatprep.subr.mxu0 0.0
  %864 = vmatpush1.msra.mxu0 0.0
  %865 = vmatprep.subr.mxu0 0.0
  %866 = vmatpush1.msra.mxu0 0.0
  %867 = vmatprep.subr.mxu0 0.0
  %868 = vmatpush1.msra.mxu0 0.0
  %869 = vmatprep.subr.mxu0 0.0
  %870 = vmatpush1.msra.mxu0 0.0
  %871 = vmatprep.subr.mxu0 0.0
  %872 = vmatpush1.msra.mxu0 0.0
  %873 = vmatprep.subr.mxu0 0.0
  %874 = vmatpush1.msra.mxu0 0.0
  %875 = vmatprep.mubr.f32.mxu0 0.0
  %876 = vmatmul.mubr.f32.gmra.mrb[0].mxu0 %v803
  %v877 = vpop.f32.mrb[0].mxu0
  %v878 = vadd.f32 0.0, %v877
  %v879 = vpop.f32.mrb[0].mxu0
  %v880 = vadd.f32 0.0, %v879
  %881 = vdwg.mxu0
  %882 = vmatprep.subr.mxu0 0.0
  %883 = vmatpush1.msra.mxu0 %v26
  %884 = vmatprep.subr.mxu0 0.0
  %885 = vmatpush1.msra.mxu0 %v29
  %886 = vmatprep.subr.mxu0 0.0
  %887 = vmatpush1.msra.mxu0 %v32
  %888 = vmatprep.subr.mxu0 0.0
  %889 = vmatpush1.msra.mxu0 %v35
  %890 = vmatprep.subr.mxu0 0.0
  %891 = vmatpush1.msra.mxu0 %v38
  %892 = vmatprep.subr.mxu0 0.0
  %893 = vmatpush1.msra.mxu0 %v41
  %894 = vmatprep.subr.mxu0 0.0
  %895 = vmatpush1.msra.mxu0 %v44
  %896 = vmatprep.subr.mxu0 0.0
  %897 = vmatpush1.msra.mxu0 %v47
  %898 = vmatprep.subr.mxu0 0.0
  %899 = vmatpush1.msra.mxu0 %v50
  %900 = vmatprep.subr.mxu0 0.0
  %901 = vmatpush1.msra.mxu0 %v53
  %902 = vmatprep.subr.mxu0 0.0
  %903 = vmatpush1.msra.mxu0 %v56
  %904 = vmatprep.subr.mxu0 0.0
  %905 = vmatpush1.msra.mxu0 %v59
  %906 = vmatprep.subr.mxu0 0.0
  %907 = vmatpush1.msra.mxu0 %v62
  %908 = vmatprep.subr.mxu0 0.0
  %909 = vmatpush1.msra.mxu0 %v65
  %910 = vmatprep.subr.mxu0 0.0
  %911 = vmatpush1.msra.mxu0 %v68
  %912 = vmatprep.subr.mxu0 0.0
  %913 = vmatpush1.msra.mxu0 %v71
  %914 = vmatprep.subr.mxu0 0.0
  %915 = vmatpush1.msra.mxu0 0.0
  %916 = vmatprep.subr.mxu0 0.0
  %917 = vmatpush1.msra.mxu0 0.0
  %918 = vmatprep.subr.mxu0 0.0
  %919 = vmatpush1.msra.mxu0 0.0
  %920 = vmatprep.subr.mxu0 0.0
  %921 = vmatpush1.msra.mxu0 0.0
  %922 = vmatprep.subr.mxu0 0.0
  %923 = vmatpush1.msra.mxu0 0.0
  %924 = vmatprep.subr.mxu0 0.0
  %925 = vmatpush1.msra.mxu0 0.0
  %926 = vmatprep.subr.mxu0 0.0
  %927 = vmatpush1.msra.mxu0 0.0
  %928 = vmatprep.subr.mxu0 0.0
  %929 = vmatpush1.msra.mxu0 0.0
  %930 = vmatprep.subr.mxu0 0.0
  %931 = vmatpush1.msra.mxu0 0.0
  %932 = vmatprep.subr.mxu0 0.0
  %933 = vmatpush1.msra.mxu0 0.0
  %934 = vmatprep.subr.mxu0 0.0
  %935 = vmatpush1.msra.mxu0 0.0
  %936 = vmatprep.subr.mxu0 0.0
  %937 = vmatpush1.msra.mxu0 0.0
  %938 = vmatprep.subr.mxu0 0.0
  %939 = vmatpush1.msra.mxu0 0.0
  %940 = vmatprep.subr.mxu0 0.0
  %941 = vmatpush1.msra.mxu0 0.0
  %942 = vmatprep.subr.mxu0 0.0
  %943 = vmatpush1.msra.mxu0 0.0
  %944 = vmatprep.subr.mxu0 0.0
  %945 = vmatpush1.msra.mxu0 0.0
  %946 = vmatprep.mubr.f32.mxu0 0.0
  %947 = vmatmul.mubr.f32.gmra.mrb[0].mxu0 %v803
  %v948 = vpop.f32.mrb[0].mxu0
  %v949 = vadd.f32 0.0, %v948
  %v950 = vpop.f32.mrb[0].mxu0
  %951 = vdwg.mxu0
  %v952 = vadd.f32 %v808, %v878
  %v953 = vxor.u32 %v952, 2147483648
  %v954 = vmul.f32 %v953, 1.442695
  %v955 = vpow.pop %v954
  %v956 = vadd.f32 %v955, 1.0
  %v957 = vrcp.pop %v956
  %v958 = vmul.f32 1.0, %v957
  %v959 = vadd.f32 %v809, %v880
  %v960 = vxor.u32 %v959, 2147483648
  %v961 = vmul.f32 %v960, 1.442695
  %v962 = vpow.pop %v961
  %v963 = vadd.f32 %v962, 1.0
  %v964 = vrcp.pop %v963
  %v965 = vmul.f32 1.0, %v964
  %v966 = vadd.f32 %v949, %v78
  %v967 = vmul.f32 %v958, %v966
  %v968 = vadd.f32 %v810, %v967
  %v969 = vtanh.pop %v968
  %v970 = vsub.f32 %v803, %v969
  %v971 = vmul.f32 %v965, %v970
  %v972 = vadd.f32 %v969, %v971
  %s973 = sadd.s32 %s80, 4
  %v974 = vstv %s973
  %vm975 = vcmp.lt.s32.totalorder %v974, %v72
  %v976 = vsel %vm975, 1, 0
  %v977 = vcvt.s32.f32 %v976
  %v978 = vsub.f32 %v972, %v803
  %980 = vset.pattern.permute.xlu0 0
  %981 = vperm.xlu0 %980, %v977
  %v982 = vpop.permute.xlu0 %981
  %v984 = vmul.f32 %v982, %v978
  %v985 = vadd.f32 %v803, %v984
  %v986 = vmul.f32 %v982, %v985
  %s987 = scalar_lea.vmem %s4, 32
  %988 = vst [vmem:[%s987] sm:$0xff] %v986
  %s989 = scalar_lea.vmem %s0, 120
  %v990 = vld [vmem:[%s989] sm:$0xff]
  %v991 = vld [vmem:[%s989 + $0x8] sm:$0xff]
  %v992 = vld [vmem:[%s989 + $0x10] sm:$0xff]
  %993 = vmatprep.subr.mxu0 %v25
  %994 = vmatpush1.msra.mxu0 %v24
  %995 = vmatprep.subr.mxu0 %v28
  %996 = vmatpush1.msra.mxu0 %v27
  %997 = vmatprep.subr.mxu0 %v31
  %998 = vmatpush1.msra.mxu0 %v30
  %999 = vmatprep.subr.mxu0 %v34
  %1000 = vmatpush1.msra.mxu0 %v33
  %1001 = vmatprep.subr.mxu0 %v37
  %1002 = vmatpush1.msra.mxu0 %v36
  %1003 = vmatprep.subr.mxu0 %v40
  %1004 = vmatpush1.msra.mxu0 %v39
  %1005 = vmatprep.subr.mxu0 %v43
  %1006 = vmatpush1.msra.mxu0 %v42
  %1007 = vmatprep.subr.mxu0 %v46
  %1008 = vmatpush1.msra.mxu0 %v45
  %1009 = vmatprep.subr.mxu0 %v49
  %1010 = vmatpush1.msra.mxu0 %v48
  %1011 = vmatprep.subr.mxu0 %v52
  %1012 = vmatpush1.msra.mxu0 %v51
  %1013 = vmatprep.subr.mxu0 %v55
  %1014 = vmatpush1.msra.mxu0 %v54
  %1015 = vmatprep.subr.mxu0 %v58
  %1016 = vmatpush1.msra.mxu0 %v57
  %1017 = vmatprep.subr.mxu0 %v61
  %1018 = vmatpush1.msra.mxu0 %v60
  %1019 = vmatprep.subr.mxu0 %v64
  %1020 = vmatpush1.msra.mxu0 %v63
  %1021 = vmatprep.subr.mxu0 %v67
  %1022 = vmatpush1.msra.mxu0 %v66
  %1023 = vmatprep.subr.mxu0 %v70
  %1024 = vmatpush1.msra.mxu0 %v69
  %1025 = vmatprep.subr.mxu0 0.0
  %1026 = vmatpush1.msra.mxu0 0.0
  %1027 = vmatprep.subr.mxu0 0.0
  %1028 = vmatpush1.msra.mxu0 0.0
  %1029 = vmatprep.subr.mxu0 0.0
  %1030 = vmatpush1.msra.mxu0 0.0
  %1031 = vmatprep.subr.mxu0 0.0
  %1032 = vmatpush1.msra.mxu0 0.0
  %1033 = vmatprep.subr.mxu0 0.0
  %1034 = vmatpush1.msra.mxu0 0.0
  %1035 = vmatprep.subr.mxu0 0.0
  %1036 = vmatpush1.msra.mxu0 0.0
  %1037 = vmatprep.subr.mxu0 0.0
  %1038 = vmatpush1.msra.mxu0 0.0
  %1039 = vmatprep.subr.mxu0 0.0
  %1040 = vmatpush1.msra.mxu0 0.0
  %1041 = vmatprep.subr.mxu0 0.0
  %1042 = vmatpush1.msra.mxu0 0.0
  %1043 = vmatprep.subr.mxu0 0.0
  %1044 = vmatpush1.msra.mxu0 0.0
  %1045 = vmatprep.subr.mxu0 0.0
  %1046 = vmatpush1.msra.mxu0 0.0
  %1047 = vmatprep.subr.mxu0 0.0
  %1048 = vmatpush1.msra.mxu0 0.0
  %1049 = vmatprep.subr.mxu0 0.0
  %1050 = vmatpush1.msra.mxu0 0.0
  %1051 = vmatprep.subr.mxu0 0.0
  %1052 = vmatpush1.msra.mxu0 0.0
  %1053 = vmatprep.subr.mxu0 0.0
  %1054 = vmatpush1.msra.mxu0 0.0
  %1055 = vmatprep.subr.mxu0 0.0
  %1056 = vmatpush1.msra.mxu0 0.0
  %1057 = vmatprep.mubr.f32.mxu0 0.0
  %1058 = vmatmul.mubr.f32.gmra.mrb[0].mxu0 %v985
  %v1059 = vpop.f32.mrb[0].mxu0
  %v1060 = vadd.f32 0.0, %v1059
  %v1061 = vpop.f32.mrb[0].mxu0
  %v1062 = vadd.f32 0.0, %v1061
  %1063 = vdwg.mxu0
  %1064 = vmatprep.subr.mxu0 0.0
  %1065 = vmatpush1.msra.mxu0 %v26
  %1066 = vmatprep.subr.mxu0 0.0
  %1067 = vmatpush1.msra.mxu0 %v29
  %1068 = vmatprep.subr.mxu0 0.0
  %1069 = vmatpush1.msra.mxu0 %v32
  %1070 = vmatprep.subr.mxu0 0.0
  %1071 = vmatpush1.msra.mxu0 %v35
  %1072 = vmatprep.subr.mxu0 0.0
  %1073 = vmatpush1.msra.mxu0 %v38
  %1074 = vmatprep.subr.mxu0 0.0
  %1075 = vmatpush1.msra.mxu0 %v41
  %1076 = vmatprep.subr.mxu0 0.0
  %1077 = vmatpush1.msra.mxu0 %v44
  %1078 = vmatprep.subr.mxu0 0.0
  %1079 = vmatpush1.msra.mxu0 %v47
  %1080 = vmatprep.subr.mxu0 0.0
  %1081 = vmatpush1.msra.mxu0 %v50
  %1082 = vmatprep.subr.mxu0 0.0
  %1083 = vmatpush1.msra.mxu0 %v53
  %1084 = vmatprep.subr.mxu0 0.0
  %1085 = vmatpush1.msra.mxu0 %v56
  %1086 = vmatprep.subr.mxu0 0.0
  %1087 = vmatpush1.msra.mxu0 %v59
  %1088 = vmatprep.subr.mxu0 0.0
  %1089 = vmatpush1.msra.mxu0 %v62
  %1090 = vmatprep.subr.mxu0 0.0
  %1091 = vmatpush1.msra.mxu0 %v65
  %1092 = vmatprep.subr.mxu0 0.0
  %1093 = vmatpush1.msra.mxu0 %v68
  %1094 = vmatprep.subr.mxu0 0.0
  %1095 = vmatpush1.msra.mxu0 %v71
  %1096 = vmatprep.subr.mxu0 0.0
  %1097 = vmatpush1.msra.mxu0 0.0
  %1098 = vmatprep.subr.mxu0 0.0
  %1099 = vmatpush1.msra.mxu0 0.0
  %1100 = vmatprep.subr.mxu0 0.0
  %1101 = vmatpush1.msra.mxu0 0.0
  %1102 = vmatprep.subr.mxu0 0.0
  %1103 = vmatpush1.msra.mxu0 0.0
  %1104 = vmatprep.subr.mxu0 0.0
  %1105 = vmatpush1.msra.mxu0 0.0
  %1106 = vmatprep.subr.mxu0 0.0
  %1107 = vmatpush1.msra.mxu0 0.0
  %1108 = vmatprep.subr.mxu0 0.0
  %1109 = vmatpush1.msra.mxu0 0.0
  %1110 = vmatprep.subr.mxu0 0.0
  %1111 = vmatpush1.msra.mxu0 0.0
  %1112 = vmatprep.subr.mxu0 0.0
  %1113 = vmatpush1.msra.mxu0 0.0
  %1114 = vmatprep.subr.mxu0 0.0
  %1115 = vmatpush1.msra.mxu0 0.0
  %1116 = vmatprep.subr.mxu0 0.0
  %1117 = vmatpush1.msra.mxu0 0.0
  %1118 = vmatprep.subr.mxu0 0.0
  %1119 = vmatpush1.msra.mxu0 0.0
  %1120 = vmatprep.subr.mxu0 0.0
  %1121 = vmatpush1.msra.mxu0 0.0
  %1122 = vmatprep.subr.mxu0 0.0
  %1123 = vmatpush1.msra.mxu0 0.0
  %1124 = vmatprep.subr.mxu0 0.0
  %1125 = vmatpush1.msra.mxu0 0.0
  %1126 = vmatprep.subr.mxu0 0.0
  %1127 = vmatpush1.msra.mxu0 0.0
  %1128 = vmatprep.mubr.f32.mxu0 0.0
  %1129 = vmatmul.mubr.f32.gmra.mrb[0].mxu0 %v985
  %v1130 = vpop.f32.mrb[0].mxu0
  %v1131 = vadd.f32 0.0, %v1130
  %v1132 = vpop.f32.mrb[0].mxu0
  %1133 = vdwg.mxu0
  %v1134 = vadd.f32 %v990, %v1060
  %v1135 = vxor.u32 %v1134, 2147483648
  %v1136 = vmul.f32 %v1135, 1.442695
  %v1137 = vpow.pop %v1136
  %v1138 = vadd.f32 %v1137, 1.0
  %v1139 = vrcp.pop %v1138
  %v1140 = vmul.f32 1.0, %v1139
  %v1141 = vadd.f32 %v991, %v1062
  %v1142 = vxor.u32 %v1141, 2147483648
  %v1143 = vmul.f32 %v1142, 1.442695
  %v1144 = vpow.pop %v1143
  %v1145 = vadd.f32 %v1144, 1.0
  %v1146 = vrcp.pop %v1145
  %v1147 = vmul.f32 1.0, %v1146
  %v1148 = vadd.f32 %v1131, %v78
  %v1149 = vmul.f32 %v1140, %v1148
  %v1150 = vadd.f32 %v992, %v1149
  %v1151 = vtanh.pop %v1150
  %v1152 = vsub.f32 %v985, %v1151
  %v1153 = vmul.f32 %v1147, %v1152
  %v1154 = vadd.f32 %v1151, %v1153
  %s1155 = sadd.s32 %s80, 5
  %v1156 = vstv %s1155
  %vm1157 = vcmp.lt.s32.totalorder %v1156, %v72
  %v1158 = vsel %vm1157, 1, 0
  %v1159 = vcvt.s32.f32 %v1158
  %v1160 = vsub.f32 %v1154, %v985
  %1162 = vset.pattern.permute.xlu0 0
  %1163 = vperm.xlu0 %1162, %v1159
  %v1164 = vpop.permute.xlu0 %1163
  %v1166 = vmul.f32 %v1164, %v1160
  %v1167 = vadd.f32 %v985, %v1166
  %v1168 = vmul.f32 %v1164, %v1167
  %s1169 = scalar_lea.vmem %s4, 40
  %1170 = vst [vmem:[%s1169] sm:$0xff] %v1168
  %s1171 = scalar_lea.vmem %s0, 144
  %v1172 = vld [vmem:[%s1171] sm:$0xff]
  %v1173 = vld [vmem:[%s1171 + $0x8] sm:$0xff]
  %v1174 = vld [vmem:[%s1171 + $0x10] sm:$0xff]
  %1175 = vmatprep.subr.mxu0 %v25
  %1176 = vmatpush1.msra.mxu0 %v24
  %1177 = vmatprep.subr.mxu0 %v28
  %1178 = vmatpush1.msra.mxu0 %v27
  %1179 = vmatprep.subr.mxu0 %v31
  %1180 = vmatpush1.msra.mxu0 %v30
  %1181 = vmatprep.subr.mxu0 %v34
  %1182 = vmatpush1.msra.mxu0 %v33
  %1183 = vmatprep.subr.mxu0 %v37
  %1184 = vmatpush1.msra.mxu0 %v36
  %1185 = vmatprep.subr.mxu0 %v40
  %1186 = vmatpush1.msra.mxu0 %v39
  %1187 = vmatprep.subr.mxu0 %v43
  %1188 = vmatpush1.msra.mxu0 %v42
  %1189 = vmatprep.subr.mxu0 %v46
  %1190 = vmatpush1.msra.mxu0 %v45
  %1191 = vmatprep.subr.mxu0 %v49
  %1192 = vmatpush1.msra.mxu0 %v48
  %1193 = vmatprep.subr.mxu0 %v52
  %1194 = vmatpush1.msra.mxu0 %v51
  %1195 = vmatprep.subr.mxu0 %v55
  %1196 = vmatpush1.msra.mxu0 %v54
  %1197 = vmatprep.subr.mxu0 %v58
  %1198 = vmatpush1.msra.mxu0 %v57
  %1199 = vmatprep.subr.mxu0 %v61
  %1200 = vmatpush1.msra.mxu0 %v60
  %1201 = vmatprep.subr.mxu0 %v64
  %1202 = vmatpush1.msra.mxu0 %v63
  %1203 = vmatprep.subr.mxu0 %v67
  %1204 = vmatpush1.msra.mxu0 %v66
  %1205 = vmatprep.subr.mxu0 %v70
  %1206 = vmatpush1.msra.mxu0 %v69
  %1207 = vmatprep.subr.mxu0 0.0
  %1208 = vmatpush1.msra.mxu0 0.0
  %1209 = vmatprep.subr.mxu0 0.0
  %1210 = vmatpush1.msra.mxu0 0.0
  %1211 = vmatprep.subr.mxu0 0.0
  %1212 = vmatpush1.msra.mxu0 0.0
  %1213 = vmatprep.subr.mxu0 0.0
  %1214 = vmatpush1.msra.mxu0 0.0
  %1215 = vmatprep.subr.mxu0 0.0
  %1216 = vmatpush1.msra.mxu0 0.0
  %1217 = vmatprep.subr.mxu0 0.0
  %1218 = vmatpush1.msra.mxu0 0.0
  %1219 = vmatprep.subr.mxu0 0.0
  %1220 = vmatpush1.msra.mxu0 0.0
  %1221 = vmatprep.subr.mxu0 0.0
  %1222 = vmatpush1.msra.mxu0 0.0
  %1223 = vmatprep.subr.mxu0 0.0
  %1224 = vmatpush1.msra.mxu0 0.0
  %1225 = vmatprep.subr.mxu0 0.0
  %1226 = vmatpush1.msra.mxu0 0.0
  %1227 = vmatprep.subr.mxu0 0.0
  %1228 = vmatpush1.msra.mxu0 0.0
  %1229 = vmatprep.subr.mxu0 0.0
  %1230 = vmatpush1.msra.mxu0 0.0
  %1231 = vmatprep.subr.mxu0 0.0
  %1232 = vmatpush1.msra.mxu0 0.0
  %1233 = vmatprep.subr.mxu0 0.0
  %1234 = vmatpush1.msra.mxu0 0.0
  %1235 = vmatprep.subr.mxu0 0.0
  %1236 = vmatpush1.msra.mxu0 0.0
  %1237 = vmatprep.subr.mxu0 0.0
  %1238 = vmatpush1.msra.mxu0 0.0
  %1239 = vmatprep.mubr.f32.mxu0 0.0
  %1240 = vmatmul.mubr.f32.gmra.mrb[0].mxu0 %v1167
  %v1241 = vpop.f32.mrb[0].mxu0
  %v1242 = vadd.f32 0.0, %v1241
  %v1243 = vpop.f32.mrb[0].mxu0
  %v1244 = vadd.f32 0.0, %v1243
  %1245 = vdwg.mxu0
  %1246 = vmatprep.subr.mxu0 0.0
  %1247 = vmatpush1.msra.mxu0 %v26
  %1248 = vmatprep.subr.mxu0 0.0
  %1249 = vmatpush1.msra.mxu0 %v29
  %1250 = vmatprep.subr.mxu0 0.0
  %1251 = vmatpush1.msra.mxu0 %v32
  %1252 = vmatprep.subr.mxu0 0.0
  %1253 = vmatpush1.msra.mxu0 %v35
  %1254 = vmatprep.subr.mxu0 0.0
  %1255 = vmatpush1.msra.mxu0 %v38
  %1256 = vmatprep.subr.mxu0 0.0
  %1257 = vmatpush1.msra.mxu0 %v41
  %1258 = vmatprep.subr.mxu0 0.0
  %1259 = vmatpush1.msra.mxu0 %v44
  %1260 = vmatprep.subr.mxu0 0.0
  %1261 = vmatpush1.msra.mxu0 %v47
  %1262 = vmatprep.subr.mxu0 0.0
  %1263 = vmatpush1.msra.mxu0 %v50
  %1264 = vmatprep.subr.mxu0 0.0
  %1265 = vmatpush1.msra.mxu0 %v53
  %1266 = vmatprep.subr.mxu0 0.0
  %1267 = vmatpush1.msra.mxu0 %v56
  %1268 = vmatprep.subr.mxu0 0.0
  %1269 = vmatpush1.msra.mxu0 %v59
  %1270 = vmatprep.subr.mxu0 0.0
  %1271 = vmatpush1.msra.mxu0 %v62
  %1272 = vmatprep.subr.mxu0 0.0
  %1273 = vmatpush1.msra.mxu0 %v65
  %1274 = vmatprep.subr.mxu0 0.0
  %1275 = vmatpush1.msra.mxu0 %v68
  %1276 = vmatprep.subr.mxu0 0.0
  %1277 = vmatpush1.msra.mxu0 %v71
  %1278 = vmatprep.subr.mxu0 0.0
  %1279 = vmatpush1.msra.mxu0 0.0
  %1280 = vmatprep.subr.mxu0 0.0
  %1281 = vmatpush1.msra.mxu0 0.0
  %1282 = vmatprep.subr.mxu0 0.0
  %1283 = vmatpush1.msra.mxu0 0.0
  %1284 = vmatprep.subr.mxu0 0.0
  %1285 = vmatpush1.msra.mxu0 0.0
  %1286 = vmatprep.subr.mxu0 0.0
  %1287 = vmatpush1.msra.mxu0 0.0
  %1288 = vmatprep.subr.mxu0 0.0
  %1289 = vmatpush1.msra.mxu0 0.0
  %1290 = vmatprep.subr.mxu0 0.0
  %1291 = vmatpush1.msra.mxu0 0.0
  %1292 = vmatprep.subr.mxu0 0.0
  %1293 = vmatpush1.msra.mxu0 0.0
  %1294 = vmatprep.subr.mxu0 0.0
  %1295 = vmatpush1.msra.mxu0 0.0
  %1296 = vmatprep.subr.mxu0 0.0
  %1297 = vmatpush1.msra.mxu0 0.0
  %1298 = vmatprep.subr.mxu0 0.0
  %1299 = vmatpush1.msra.mxu0 0.0
  %1300 = vmatprep.subr.mxu0 0.0
  %1301 = vmatpush1.msra.mxu0 0.0
  %1302 = vmatprep.subr.mxu0 0.0
  %1303 = vmatpush1.msra.mxu0 0.0
  %1304 = vmatprep.subr.mxu0 0.0
  %1305 = vmatpush1.msra.mxu0 0.0
  %1306 = vmatprep.subr.mxu0 0.0
  %1307 = vmatpush1.msra.mxu0 0.0
  %1308 = vmatprep.subr.mxu0 0.0
  %1309 = vmatpush1.msra.mxu0 0.0
  %1310 = vmatprep.mubr.f32.mxu0 0.0
  %1311 = vmatmul.mubr.f32.gmra.mrb[0].mxu0 %v1167
  %v1312 = vpop.f32.mrb[0].mxu0
  %v1313 = vadd.f32 0.0, %v1312
  %v1314 = vpop.f32.mrb[0].mxu0
  %1315 = vdwg.mxu0
  %v1316 = vadd.f32 %v1172, %v1242
  %v1317 = vxor.u32 %v1316, 2147483648
  %v1318 = vmul.f32 %v1317, 1.442695
  %v1319 = vpow.pop %v1318
  %v1320 = vadd.f32 %v1319, 1.0
  %v1321 = vrcp.pop %v1320
  %v1322 = vmul.f32 1.0, %v1321
  %v1323 = vadd.f32 %v1173, %v1244
  %v1324 = vxor.u32 %v1323, 2147483648
  %v1325 = vmul.f32 %v1324, 1.442695
  %v1326 = vpow.pop %v1325
  %v1327 = vadd.f32 %v1326, 1.0
  %v1328 = vrcp.pop %v1327
  %v1329 = vmul.f32 1.0, %v1328
  %v1330 = vadd.f32 %v1313, %v78
  %v1331 = vmul.f32 %v1322, %v1330
  %v1332 = vadd.f32 %v1174, %v1331
  %v1333 = vtanh.pop %v1332
  %v1334 = vsub.f32 %v1167, %v1333
  %v1335 = vmul.f32 %v1329, %v1334
  %v1336 = vadd.f32 %v1333, %v1335
  %s1337 = sadd.s32 %s80, 6
  %v1338 = vstv %s1337
  %vm1339 = vcmp.lt.s32.totalorder %v1338, %v72
  %v1340 = vsel %vm1339, 1, 0
  %v1341 = vcvt.s32.f32 %v1340
  %v1342 = vsub.f32 %v1336, %v1167
  %1344 = vset.pattern.permute.xlu0 0
  %1345 = vperm.xlu0 %1344, %v1341
  %v1346 = vpop.permute.xlu0 %1345
  %v1348 = vmul.f32 %v1346, %v1342
  %v1349 = vadd.f32 %v1167, %v1348
  %v1350 = vmul.f32 %v1346, %v1349
  %s1351 = scalar_lea.vmem %s4, 48
  %1352 = vst [vmem:[%s1351] sm:$0xff] %v1350
  %s1353 = scalar_lea.vmem %s0, 168
  %v1354 = vld [vmem:[%s1353] sm:$0xff]
  %v1355 = vld [vmem:[%s1353 + $0x8] sm:$0xff]
  %v1356 = vld [vmem:[%s1353 + $0x10] sm:$0xff]
  %1357 = vmatprep.subr.mxu0 %v25
  %1358 = vmatpush1.msra.mxu0 %v24
  %1359 = vmatprep.subr.mxu0 %v28
  %1360 = vmatpush1.msra.mxu0 %v27
  %1361 = vmatprep.subr.mxu0 %v31
  %1362 = vmatpush1.msra.mxu0 %v30
  %1363 = vmatprep.subr.mxu0 %v34
  %1364 = vmatpush1.msra.mxu0 %v33
  %1365 = vmatprep.subr.mxu0 %v37
  %1366 = vmatpush1.msra.mxu0 %v36
  %1367 = vmatprep.subr.mxu0 %v40
  %1368 = vmatpush1.msra.mxu0 %v39
  %1369 = vmatprep.subr.mxu0 %v43
  %1370 = vmatpush1.msra.mxu0 %v42
  %1371 = vmatprep.subr.mxu0 %v46
  %1372 = vmatpush1.msra.mxu0 %v45
  %1373 = vmatprep.subr.mxu0 %v49
  %1374 = vmatpush1.msra.mxu0 %v48
  %1375 = vmatprep.subr.mxu0 %v52
  %1376 = vmatpush1.msra.mxu0 %v51
  %1377 = vmatprep.subr.mxu0 %v55
  %1378 = vmatpush1.msra.mxu0 %v54
  %1379 = vmatprep.subr.mxu0 %v58
  %1380 = vmatpush1.msra.mxu0 %v57
  %1381 = vmatprep.subr.mxu0 %v61
  %1382 = vmatpush1.msra.mxu0 %v60
  %1383 = vmatprep.subr.mxu0 %v64
  %1384 = vmatpush1.msra.mxu0 %v63
  %1385 = vmatprep.subr.mxu0 %v67
  %1386 = vmatpush1.msra.mxu0 %v66
  %1387 = vmatprep.subr.mxu0 %v70
  %1388 = vmatpush1.msra.mxu0 %v69
  %1389 = vmatprep.subr.mxu0 0.0
  %1390 = vmatpush1.msra.mxu0 0.0
  %1391 = vmatprep.subr.mxu0 0.0
  %1392 = vmatpush1.msra.mxu0 0.0
  %1393 = vmatprep.subr.mxu0 0.0
  %1394 = vmatpush1.msra.mxu0 0.0
  %1395 = vmatprep.subr.mxu0 0.0
  %1396 = vmatpush1.msra.mxu0 0.0
  %1397 = vmatprep.subr.mxu0 0.0
  %1398 = vmatpush1.msra.mxu0 0.0
  %1399 = vmatprep.subr.mxu0 0.0
  %1400 = vmatpush1.msra.mxu0 0.0
  %1401 = vmatprep.subr.mxu0 0.0
  %1402 = vmatpush1.msra.mxu0 0.0
  %1403 = vmatprep.subr.mxu0 0.0
  %1404 = vmatpush1.msra.mxu0 0.0
  %1405 = vmatprep.subr.mxu0 0.0
  %1406 = vmatpush1.msra.mxu0 0.0
  %1407 = vmatprep.subr.mxu0 0.0
  %1408 = vmatpush1.msra.mxu0 0.0
  %1409 = vmatprep.subr.mxu0 0.0
  %1410 = vmatpush1.msra.mxu0 0.0
  %1411 = vmatprep.subr.mxu0 0.0
  %1412 = vmatpush1.msra.mxu0 0.0
  %1413 = vmatprep.subr.mxu0 0.0
  %1414 = vmatpush1.msra.mxu0 0.0
  %1415 = vmatprep.subr.mxu0 0.0
  %1416 = vmatpush1.msra.mxu0 0.0
  %1417 = vmatprep.subr.mxu0 0.0
  %1418 = vmatpush1.msra.mxu0 0.0
  %1419 = vmatprep.subr.mxu0 0.0
  %1420 = vmatpush1.msra.mxu0 0.0
  %1421 = vmatprep.mubr.f32.mxu0 0.0
  %1422 = vmatmul.mubr.f32.gmra.mrb[0].mxu0 %v1349
  %v1423 = vpop.f32.mrb[0].mxu0
  %v1424 = vadd.f32 0.0, %v1423
  %v1425 = vpop.f32.mrb[0].mxu0
  %v1426 = vadd.f32 0.0, %v1425
  %1427 = vdwg.mxu0
  %1428 = vmatprep.subr.mxu0 0.0
  %1429 = vmatpush1.msra.mxu0 %v26
  %1430 = vmatprep.subr.mxu0 0.0
  %1431 = vmatpush1.msra.mxu0 %v29
  %1432 = vmatprep.subr.mxu0 0.0
  %1433 = vmatpush1.msra.mxu0 %v32
  %1434 = vmatprep.subr.mxu0 0.0
  %1435 = vmatpush1.msra.mxu0 %v35
  %1436 = vmatprep.subr.mxu0 0.0
  %1437 = vmatpush1.msra.mxu0 %v38
  %1438 = vmatprep.subr.mxu0 0.0
  %1439 = vmatpush1.msra.mxu0 %v41
  %1440 = vmatprep.subr.mxu0 0.0
  %1441 = vmatpush1.msra.mxu0 %v44
  %1442 = vmatprep.subr.mxu0 0.0
  %1443 = vmatpush1.msra.mxu0 %v47
  %1444 = vmatprep.subr.mxu0 0.0
  %1445 = vmatpush1.msra.mxu0 %v50
  %1446 = vmatprep.subr.mxu0 0.0
  %1447 = vmatpush1.msra.mxu0 %v53
  %1448 = vmatprep.subr.mxu0 0.0
  %1449 = vmatpush1.msra.mxu0 %v56
  %1450 = vmatprep.subr.mxu0 0.0
  %1451 = vmatpush1.msra.mxu0 %v59
  %1452 = vmatprep.subr.mxu0 0.0
  %1453 = vmatpush1.msra.mxu0 %v62
  %1454 = vmatprep.subr.mxu0 0.0
  %1455 = vmatpush1.msra.mxu0 %v65
  %1456 = vmatprep.subr.mxu0 0.0
  %1457 = vmatpush1.msra.mxu0 %v68
  %1458 = vmatprep.subr.mxu0 0.0
  %1459 = vmatpush1.msra.mxu0 %v71
  %1460 = vmatprep.subr.mxu0 0.0
  %1461 = vmatpush1.msra.mxu0 0.0
  %1462 = vmatprep.subr.mxu0 0.0
  %1463 = vmatpush1.msra.mxu0 0.0
  %1464 = vmatprep.subr.mxu0 0.0
  %1465 = vmatpush1.msra.mxu0 0.0
  %1466 = vmatprep.subr.mxu0 0.0
  %1467 = vmatpush1.msra.mxu0 0.0
  %1468 = vmatprep.subr.mxu0 0.0
  %1469 = vmatpush1.msra.mxu0 0.0
  %1470 = vmatprep.subr.mxu0 0.0
  %1471 = vmatpush1.msra.mxu0 0.0
  %1472 = vmatprep.subr.mxu0 0.0
  %1473 = vmatpush1.msra.mxu0 0.0
  %1474 = vmatprep.subr.mxu0 0.0
  %1475 = vmatpush1.msra.mxu0 0.0
  %1476 = vmatprep.subr.mxu0 0.0
  %1477 = vmatpush1.msra.mxu0 0.0
  %1478 = vmatprep.subr.mxu0 0.0
  %1479 = vmatpush1.msra.mxu0 0.0
  %1480 = vmatprep.subr.mxu0 0.0
  %1481 = vmatpush1.msra.mxu0 0.0
  %1482 = vmatprep.subr.mxu0 0.0
  %1483 = vmatpush1.msra.mxu0 0.0
  %1484 = vmatprep.subr.mxu0 0.0
  %1485 = vmatpush1.msra.mxu0 0.0
  %1486 = vmatprep.subr.mxu0 0.0
  %1487 = vmatpush1.msra.mxu0 0.0
  %1488 = vmatprep.subr.mxu0 0.0
  %1489 = vmatpush1.msra.mxu0 0.0
  %1490 = vmatprep.subr.mxu0 0.0
  %1491 = vmatpush1.msra.mxu0 0.0
  %1492 = vmatprep.mubr.f32.mxu0 0.0
  %1493 = vmatmul.mubr.f32.gmra.mrb[0].mxu0 %v1349
  %v1494 = vpop.f32.mrb[0].mxu0
  %v1495 = vadd.f32 0.0, %v1494
  %v1496 = vpop.f32.mrb[0].mxu0
  %1497 = vdwg.mxu0
  %v1498 = vadd.f32 %v1354, %v1424
  %v1499 = vxor.u32 %v1498, 2147483648
  %v1500 = vmul.f32 %v1499, 1.442695
  %v1501 = vpow.pop %v1500
  %v1502 = vadd.f32 %v1501, 1.0
  %v1503 = vrcp.pop %v1502
  %v1504 = vmul.f32 1.0, %v1503
  %v1505 = vadd.f32 %v1355, %v1426
  %v1506 = vxor.u32 %v1505, 2147483648
  %v1507 = vmul.f32 %v1506, 1.442695
  %v1508 = vpow.pop %v1507
  %v1509 = vadd.f32 %v1508, 1.0
  %v1510 = vrcp.pop %v1509
  %v1511 = vmul.f32 1.0, %v1510
  %v1512 = vadd.f32 %v1495, %v78
  %v1513 = vmul.f32 %v1504, %v1512
  %v1514 = vadd.f32 %v1356, %v1513
  %v1515 = vtanh.pop %v1514
  %v1516 = vsub.f32 %v1349, %v1515
  %v1517 = vmul.f32 %v1511, %v1516
  %v1518 = vadd.f32 %v1515, %v1517
  %s1519 = sadd.s32 %s80, 7
  %v1520 = vstv %s1519
  %vm1521 = vcmp.lt.s32.totalorder %v1520, %v72
  %v1522 = vsel %vm1521, 1, 0
  %v1523 = vcvt.s32.f32 %v1522
  %v1524 = vsub.f32 %v1518, %v1349
  %1526 = vset.pattern.permute.xlu0 0
  %1527 = vperm.xlu0 %1526, %v1523
  %v1528 = vpop.permute.xlu0 %1527
  %v1530 = vmul.f32 %v1528, %v1524
  %v1531 = vadd.f32 %v1349, %v1530
  %v1532 = vmul.f32 %v1528, %v1531
  %s1533 = scalar_lea.vmem %s4, 56
  %1534 = vst [vmem:[%s1533] sm:$0xff] %v1532
  %1535 = vst [vmem:[#allocation2] sm:$0xff] %v1531
  // Predicated region
  $region22: #{encoder_forward.1} parent=0 // pred_check
    %p1536 = pneg %p19
  $region23: #{encoder_forward.1} parent=0 // pred_check_branch
    %1538 = sbr.rel (%p1536) target = $region25
  $region24: #{encoder_forward.1} parent=0 // pred_region
    %1539 = vst [vmem:[%s5] sm:$0xff] %v1531
  $region25: #{encoder_forward.1} parent=0 // pred_fallthru
    _
  // Predicated region
  $region26: #{encoder_forward.1} parent=0 // pred_check
    _
  $region27: #{encoder_forward.1} parent=0 // pred_check_branch
    %1541 = sbr.rel (0) target = $region29
  $region28: #{encoder_forward.1} parent=0 // pred_region
    _
  $region29: #{encoder_forward.1} parent=0 // pred_fallthru
    _
  // Predicated region
  $region30: #{encoder_forward.1} parent=0 // pred_check
    _
  $region31: #{encoder_forward.1} parent=0 // pred_check_branch
    %1543 = sbr.rel (0) target = $region33
  $region32: #{encoder_forward.1} parent=0 // pred_region
    _
  $region33: #{encoder_forward.1} parent=0 // pred_fallthru
    _
  // Predicated region
  $region34: #{encoder_forward.1} parent=0 // pred_check
    _
  $region35: #{encoder_forward.1} parent=0 // pred_check_branch
    %1545 = sbr.rel (0) target = $region37
  $region36: #{encoder_forward.1} parent=0 // pred_region
    _
  $region37: #{encoder_forward.1} parent=0 // pred_fallthru
    _
  // Predicated region
  $region38: #{encoder_forward.1} parent=0 // pred_check
    _
  $region39: #{encoder_forward.1} parent=0 // pred_check_branch
    %1547 = sbr.rel (0) target = $region41
  $region40: #{encoder_forward.1} parent=0 // pred_region
    _
  $region41: #{encoder_forward.1} parent=0 // pred_fallthru
    _

</llo_original>
